<compile_context>
chip_gen: v6e
topology: v6e:2x2x1
jax: 0.10.0
libtpu: 0.0.40
codegen_flags: <defaults>
</compile_context>

<pallas_src>
import functools

import numpy as np
import jax
import jax.numpy as jnp
from jax.experimental import pallas as pl
from jax.experimental.pallas import tpu as pltpu


# ---------------------------------------------------------------------------
# Bilinear interpolation matrix (align_corners=False, half-pixel centers),
# matching kornia.resize / torch F.interpolate(mode="bilinear").
# ---------------------------------------------------------------------------
def bilinear_matrix(out_size: int, in_size: int) -> np.ndarray:
    A = np.zeros((out_size, in_size), dtype=np.float32)
    scale = in_size / out_size
    for i in range(out_size):
        src = (i + 0.5) * scale - 0.5
        i0 = int(np.floor(src))
        frac = src - i0
        i0c = min(max(i0, 0), in_size - 1)
        i1c = min(max(i0 + 1, 0), in_size - 1)
        A[i, i0c] += 1.0 - frac
        A[i, i1c] += frac
    return A


# ---------------------------------------------------------------------------
# Fused kernel: per grid step = one sample.
#   x_ref    (Cin, Pin)   flattened input planes (rgb+segm), Pin = Hin*Win
#   bT_ref   (Pin, Pout)  kron(Ah, Aw)^T : the bilinear-resize operator
#   w1t_ref  (Ch, Cin)    conv1 weight, channels-first
#   b1c_ref  (Ch, 1)
#   w2t_ref  (Ch, Ch)     conv2 weight, channels-first
#   b2c_ref  (Ch, 1)
#   w3_ref   (Ch, 1)      head weight
#   b3_ref   (1, 1)
#   loss_ref (1, 1)       per-sample softplus(-score)
# ---------------------------------------------------------------------------
def fused_criterion_kernel(x_ref, bT_ref, w1t_ref, b1c_ref, w2t_ref, b2c_ref,
                           w3_ref, b3_ref, loss_ref, *, cin):
    # Bilinear resize of the Cin raw channels as a single MXU matmul.
    # Output (Cin, Pout) is lane-dense: Pout = Hout*Wout = 1024 = 8*128.
    # (Resizing the 4 raw channels -- instead of the 32 post-conv1 channels --
    #  is 8x fewer MXU FLOPs for the same result; conv1 commutes with resize.)
    r = jnp.dot(x_ref[...], bT_ref[...],
                preferred_element_type=jnp.float32)          # (Cin, Pout)

    # conv1 (1x1): degenerate K = Cin = 4 contraction -> unrolled VPU FMAs
    # (outer products), keeping the MXU for the real work.
    w1t = w1t_ref[...]                                       # (Ch, Cin)
    h1 = w1t[:, 0:1] * r[0:1, :]                             # (Ch, Pout)
    for c in range(1, cin):
        h1 = h1 + w1t[:, c:c + 1] * r[c:c + 1, :]
    h1 = h1 + b1c_ref[...]
    h1 = jnp.where(h1 > 0, h1, 0.2 * h1)                     # leaky_relu(0.2)

    # conv2 as channels-first MXU matmul: (Ch, Ch) @ (Ch, Pout).
    h2 = jnp.dot(w2t_ref[...], h1, preferred_element_type=jnp.float32)
    h2 = h2 + b2c_ref[...]
    h2 = jnp.where(h2 > 0, h2, 0.2 * h2)

    # Global average pool over pixels (lane reduction) + linear head (VPU dot).
    pooled = jnp.mean(h2, axis=1, keepdims=True)                      # (Ch, 1)
    score = jnp.sum(pooled * w3_ref[...], axis=0, keepdims=True) \
        + b3_ref[...]                                                 # (1, 1) d_score

    # g_nonsaturating_loss contribution: softplus(-score), numerically stable.
    loss_ref[...] = jnp.logaddexp(0.0, -score)


# ---------------------------------------------------------------------------
# Criterion wrapper (= UnaryDiscriminatorNonsaturatingCriterion.forward)
# ---------------------------------------------------------------------------
@functools.partial(jax.jit, static_argnums=(3,))
def criterion_forward(pred_image, pred_segm, params, input_shape):
    N, _, H_in, W_in = pred_image.shape
    H_out, W_out = input_shape
    P_in, P_out = H_in * W_in, H_out * W_out

    # Concatenate rgb + segm along channels BEFORE resizing (one resize pass)
    # and flatten spatial; these are tiny pre-resize tensors.
    x = jnp.concatenate([pred_image, pred_segm], axis=1).astype(jnp.float32)
    C_in = x.shape[1]
    x_flat = x.reshape(N, C_in, P_in)                                 # (N, Cin, Pin)

    # Bilinear resize as one linear operator, passed transposed (Pin, Pout).
    # (Kept in f32; bf16 would give higher MXU throughput at real sizes but is
    # unnecessary at this scale and loosens agreement with the reference.)
    bT = jnp.asarray(
        np.kron(bilinear_matrix(H_out, H_in), bilinear_matrix(W_out, W_in)).T)

    w1, b1, w2, b2, w3, b3 = params
    Ch = w1.shape[1]
    w1t, b1c = w1.T, b1.T            # channels-first layouts for the kernel
    w2t, b2c = w2.T, b2.T

    losses = pl.pallas_call(
        functools.partial(fused_criterion_kernel, cin=C_in),
        out_shape=jax.ShapeDtypeStruct((N, 1, 1), jnp.float32),
        grid=(N,),
        in_specs=[
            pl.BlockSpec((pl.Squeezed(), C_in, P_in), lambda b: (b, 0, 0)),
            pl.BlockSpec((P_in, P_out), lambda b: (0, 0)),
            pl.BlockSpec((Ch, C_in), lambda b: (0, 0)),
            pl.BlockSpec((Ch, 1), lambda b: (0, 0)),
            pl.BlockSpec((Ch, Ch), lambda b: (0, 0)),
            pl.BlockSpec((Ch, 1), lambda b: (0, 0)),
            pl.BlockSpec((Ch, 1), lambda b: (0, 0)),
            pl.BlockSpec((1, 1), lambda b: (0, 0)),
        ],
        out_specs=pl.BlockSpec((pl.Squeezed(), 1, 1), lambda b: (b, 0, 0)),
        compiler_params=pltpu.CompilerParams(
            dimension_semantics=("parallel",)),   # batch shards across TCs on v7x
    )(x_flat, bT, w1t, b1c, w2t, b2c, w3, b3)

    # mean over per-sample softplus(-score): tiny XLA epilogue so the batch
    # grid axis can stay "parallel" (no serial in-kernel accumulator).
    return jnp.mean(losses)


# ---------------------------------------------------------------------------
# Pure-JAX reference (resize-then-discriminator, original op order).
# ---------------------------------------------------------------------------
def reference_forward(pred_image, pred_segm, params, input_shape):
    H_out, W_out = input_shape

    def resize(x):
        ah = jnp.asarray(bilinear_matrix(H_out, x.shape[2]))
        aw = jnp.asarray(bilinear_matrix(W_out, x.shape[3]))
        return jnp.einsum('ij,ncjk,lk->ncil', ah, x, aw)

    x = jnp.concatenate([resize(pred_image), resize(pred_segm)], axis=1)
    N, C, H, W = x.shape
    xp = jnp.transpose(x, (0, 2, 3, 1)).reshape(N, H * W, C)
    w1, b1, w2, b2, w3, b3 = params
    h1 = xp @ w1 + b1
    h1 = jnp.where(h1 > 0, h1, 0.2 * h1)
    h2 = h1 @ w2 + b2
    h2 = jnp.where(h2 > 0, h2, 0.2 * h2)
    pooled = jnp.mean(h2, axis=1)                   # (N, Ch) global avg pool
    score = pooled @ w3 + b3                        # (N, 1) == d_score
    return jnp.mean(jnp.logaddexp(0.0, -score))     # g_nonsaturating_loss


if __name__ == "__main__":
    key = jax.random.PRNGKey(0)
    k_img, k_seg, k1, k2, k3, k4, k5, k6 = jax.random.split(key, 8)

    # Small shapes: batch=2, rgb channels=3, segm channels=1, spatial 16x16,
    # discriminator input_shape=(32, 32), hidden width 32.
    N, H_in, W_in = 2, 16, 16
    INPUT_SHAPE = (32, 32)
    CIN, CH = 4, 32

    pred_image = jax.random.normal(k_img, (N, 3, H_in, W_in), jnp.float32)
    pred_segm = jax.random.normal(k_seg, (N, 1, H_in, W_in), jnp.float32)

    # Deterministic synthetic discriminator parameters (channels-last convention).
    params = (
        0.1 * jax.random.normal(k1, (CIN, CH), jnp.float32),
        0.1 * jax.random.normal(k4, (1, CH), jnp.float32),
        0.1 * jax.random.normal(k2, (CH, CH), jnp.float32),
        0.1 * jax.random.normal(k5, (1, CH), jnp.float32),
        0.1 * jax.random.normal(k3, (CH, 1), jnp.float32),
        0.1 * jax.random.normal(k6, (1, 1), jnp.float32),
    )

    loss = jax.block_until_ready(
        criterion_forward(pred_image, pred_segm, params, INPUT_SHAPE))
    ref = jax.block_until_ready(
        reference_forward(pred_image, pred_segm, params, INPUT_SHAPE))
    np.testing.assert_allclose(float(loss), float(ref), rtol=5e-3, atol=1e-5)

    print("KERNEL_OK")
</pallas_src>

<mosaic_0001>
module attributes {stable_mosaic.version = 11 : i64} {
  func.func @fused_criterion_kernel(%arg0: i32, %arg1: memref<1x4x256xf32, #tpu.memory_space<vmem>>, %arg2: memref<256x1024xf32, #tpu.memory_space<vmem>>, %arg3: memref<32x4xf32, #tpu.memory_space<vmem>>, %arg4: memref<32x1xf32, #tpu.memory_space<vmem>>, %arg5: memref<32x32xf32, #tpu.memory_space<vmem>>, %arg6: memref<32x1xf32, #tpu.memory_space<vmem>>, %arg7: memref<32x1xf32, #tpu.memory_space<vmem>>, %arg8: memref<1x1xf32, #tpu.memory_space<vmem>>, %arg9: memref<1x1x1xf32, #tpu.memory_space<vmem>>) attributes {dimension_semantics = [#tpu.dimension_semantics<parallel>], iteration_bounds = array<i64: 2>, scalar_prefetch = 0 : i64, scratch_operands = 0 : i64, tpu.core_type = #tpu.core_type<tc>, window_params = [{transform_indices = @transform_0, window_bounds = array<i64: 1, 4, 256>}, {pipeline_mode = #tpu.pipeline_mode<synchronous>, transform_indices = @transform_1, window_bounds = array<i64: 256, 1024>}, {pipeline_mode = #tpu.pipeline_mode<synchronous>, transform_indices = @transform_2, window_bounds = array<i64: 32, 4>}, {pipeline_mode = #tpu.pipeline_mode<synchronous>, transform_indices = @transform_3, window_bounds = array<i64: 32, 1>}, {pipeline_mode = #tpu.pipeline_mode<synchronous>, transform_indices = @transform_4, window_bounds = array<i64: 32, 32>}, {pipeline_mode = #tpu.pipeline_mode<synchronous>, transform_indices = @transform_5, window_bounds = array<i64: 32, 1>}, {pipeline_mode = #tpu.pipeline_mode<synchronous>, transform_indices = @transform_6, window_bounds = array<i64: 32, 1>}, {pipeline_mode = #tpu.pipeline_mode<synchronous>, transform_indices = @transform_7, window_bounds = array<i64: 1, 1>}, {transform_indices = @transform_8, window_bounds = array<i64: 1, 1, 1>}]} {
    %c0 = arith.constant 0 : index
    %c0_0 = arith.constant 0 : index
    %c0_1 = arith.constant 0 : index
    %0 = vector.load %arg1[%c0, %c0_0, %c0_1] : memref<1x4x256xf32, #tpu.memory_space<vmem>>, vector<1x4x256xf32>
    %1 = vector.shape_cast %0 : vector<1x4x256xf32> to vector<4x256xf32>
    %c0_2 = arith.constant 0 : index
    %c0_3 = arith.constant 0 : index
    %2 = vector.load %arg2[%c0_2, %c0_3] : memref<256x1024xf32, #tpu.memory_space<vmem>>, vector<256x1024xf32>
    %cst = arith.constant dense<0.000000e+00> : vector<4x1024xf32>
    %3 = tpu.matmul %1, %2, %cst {dimension_numbers = #tpu.dot_dimension_numbers<[1], [0], [0], [1], [0, 0, 1, 1], [], []>} : vector<4x256xf32>, vector<256x1024xf32>, vector<4x1024xf32> -> vector<4x1024xf32>
    %c0_4 = arith.constant 0 : index
    %c0_5 = arith.constant 0 : index
    %4 = vector.load %arg3[%c0_4, %c0_5] : memref<32x4xf32, #tpu.memory_space<vmem>>, vector<32x4xf32>
    %5 = vector.extract_strided_slice %4 {offsets = [0, 0], sizes = [32, 1], strides = [1, 1]} : vector<32x4xf32> to vector<32x1xf32>
    %6 = vector.extract_strided_slice %3 {offsets = [0, 0], sizes = [1, 1024], strides = [1, 1]} : vector<4x1024xf32> to vector<1x1024xf32>
    %7 = vector.broadcast %5 : vector<32x1xf32> to vector<32x1024xf32>
    %8 = vector.broadcast %6 : vector<1x1024xf32> to vector<32x1024xf32>
    %9 = arith.mulf %7, %8 : vector<32x1024xf32>
    %10 = vector.extract_strided_slice %4 {offsets = [0, 1], sizes = [32, 1], strides = [1, 1]} : vector<32x4xf32> to vector<32x1xf32>
    %11 = vector.extract_strided_slice %3 {offsets = [1, 0], sizes = [1, 1024], strides = [1, 1]} : vector<4x1024xf32> to vector<1x1024xf32>
    %12 = vector.broadcast %10 : vector<32x1xf32> to vector<32x1024xf32>
    %13 = vector.broadcast %11 : vector<1x1024xf32> to vector<32x1024xf32>
    %14 = arith.mulf %12, %13 : vector<32x1024xf32>
    %15 = arith.addf %9, %14 : vector<32x1024xf32>
    %16 = vector.extract_strided_slice %4 {offsets = [0, 2], sizes = [32, 1], strides = [1, 1]} : vector<32x4xf32> to vector<32x1xf32>
    %17 = vector.extract_strided_slice %3 {offsets = [2, 0], sizes = [1, 1024], strides = [1, 1]} : vector<4x1024xf32> to vector<1x1024xf32>
    %18 = vector.broadcast %16 : vector<32x1xf32> to vector<32x1024xf32>
    %19 = vector.broadcast %17 : vector<1x1024xf32> to vector<32x1024xf32>
    %20 = arith.mulf %18, %19 : vector<32x1024xf32>
    %21 = arith.addf %15, %20 : vector<32x1024xf32>
    %22 = vector.extract_strided_slice %4 {offsets = [0, 3], sizes = [32, 1], strides = [1, 1]} : vector<32x4xf32> to vector<32x1xf32>
    %23 = vector.extract_strided_slice %3 {offsets = [3, 0], sizes = [1, 1024], strides = [1, 1]} : vector<4x1024xf32> to vector<1x1024xf32>
    %24 = vector.broadcast %22 : vector<32x1xf32> to vector<32x1024xf32>
    %25 = vector.broadcast %23 : vector<1x1024xf32> to vector<32x1024xf32>
    %26 = arith.mulf %24, %25 : vector<32x1024xf32>
    %27 = arith.addf %21, %26 : vector<32x1024xf32>
    %c0_6 = arith.constant 0 : index
    %c0_7 = arith.constant 0 : index
    %28 = vector.load %arg4[%c0_6, %c0_7] : memref<32x1xf32, #tpu.memory_space<vmem>>, vector<32x1xf32>
    %29 = vector.broadcast %28 : vector<32x1xf32> to vector<32x1024xf32>
    %30 = arith.addf %27, %29 : vector<32x1024xf32>
    %cst_8 = arith.constant 0.000000e+00 : f32
    %31 = vector.broadcast %cst_8 : f32 to vector<32x1024xf32>
    %32 = arith.cmpf ogt, %30, %31 : vector<32x1024xf32>
    %cst_9 = arith.constant 2.000000e-01 : f32
    %33 = vector.broadcast %cst_9 : f32 to vector<32x1024xf32>
    %34 = arith.mulf %33, %30 : vector<32x1024xf32>
    %35 = arith.select %32, %30, %34 : vector<32x1024xi1>, vector<32x1024xf32>
    %c0_10 = arith.constant 0 : index
    %c0_11 = arith.constant 0 : index
    %36 = vector.load %arg5[%c0_10, %c0_11] : memref<32x32xf32, #tpu.memory_space<vmem>>, vector<32x32xf32>
    %cst_12 = arith.constant dense<0.000000e+00> : vector<32x1024xf32>
    %37 = tpu.matmul %36, %35, %cst_12 {dimension_numbers = #tpu.dot_dimension_numbers<[1], [0], [0], [1], [0, 0, 1, 1], [], []>} : vector<32x32xf32>, vector<32x1024xf32>, vector<32x1024xf32> -> vector<32x1024xf32>
    %c0_13 = arith.constant 0 : index
    %c0_14 = arith.constant 0 : index
    %38 = vector.load %arg6[%c0_13, %c0_14] : memref<32x1xf32, #tpu.memory_space<vmem>>, vector<32x1xf32>
    %39 = vector.broadcast %38 : vector<32x1xf32> to vector<32x1024xf32>
    %40 = arith.addf %37, %39 : vector<32x1024xf32>
    %cst_15 = arith.constant 0.000000e+00 : f32
    %41 = vector.broadcast %cst_15 : f32 to vector<32x1024xf32>
    %42 = arith.cmpf ogt, %40, %41 : vector<32x1024xf32>
    %cst_16 = arith.constant 2.000000e-01 : f32
    %43 = vector.broadcast %cst_16 : f32 to vector<32x1024xf32>
    %44 = arith.mulf %43, %40 : vector<32x1024xf32>
    %45 = arith.select %42, %40, %44 : vector<32x1024xi1>, vector<32x1024xf32>
    %cst_17 = arith.constant dense<0.000000e+00> : vector<32xf32>
    %46 = vector.multi_reduction <add>, %45, %cst_17 [1] : vector<32x1024xf32> to vector<32xf32>
    %47 = vector.shape_cast %46 : vector<32xf32> to vector<32x1xf32>
    %cst_18 = arith.constant 1.024000e+03 : f32
    %48 = vector.broadcast %cst_18 : f32 to vector<32x1xf32>
    %49 = arith.divf %47, %48 : vector<32x1xf32>
    %c0_19 = arith.constant 0 : index
    %c0_20 = arith.constant 0 : index
    %50 = vector.load %arg7[%c0_19, %c0_20] : memref<32x1xf32, #tpu.memory_space<vmem>>, vector<32x1xf32>
    %51 = arith.mulf %49, %50 : vector<32x1xf32>
    %cst_21 = arith.constant dense<0.000000e+00> : vector<1xf32>
    %52 = vector.multi_reduction <add>, %51, %cst_21 [0] : vector<32x1xf32> to vector<1xf32>
    %53 = vector.shape_cast %52 : vector<1xf32> to vector<1x1xf32>
    %c0_22 = arith.constant 0 : index
    %c0_23 = arith.constant 0 : index
    %54 = vector.load %arg8[%c0_22, %c0_23] : memref<1x1xf32, #tpu.memory_space<vmem>>, vector<1x1xf32>
    %55 = arith.addf %53, %54 : vector<1x1xf32>
    %cst_24 = arith.constant 0.000000e+00 : f32
    %56 = vector.broadcast %cst_24 : f32 to vector<1x1xf32>
    %57 = arith.subf %56, %55 : vector<1x1xf32>
    %cst_25 = arith.constant 0.000000e+00 : f32
    %58 = vector.broadcast %cst_25 : f32 to vector<1x1xf32>
    %59 = arith.maximumf %58, %57 : vector<1x1xf32>
    %60 = vector.broadcast %cst_25 : f32 to vector<1x1xf32>
    %61 = arith.subf %60, %57 : vector<1x1xf32>
    %62 = arith.cmpf one, %61, %61 : vector<1x1xf32>
    %63 = vector.broadcast %cst_25 : f32 to vector<1x1xf32>
    %64 = arith.addf %63, %57 : vector<1x1xf32>
    %65 = math.absf %61 : vector<1x1xf32>
    %cst_26 = arith.constant 0.000000e+00 : f32
    %66 = vector.broadcast %cst_26 : f32 to vector<1x1xf32>
    %67 = arith.subf %66, %65 : vector<1x1xf32>
    %68 = math.exp %67 : vector<1x1xf32>
    %69 = math.log1p %68 : vector<1x1xf32>
    %70 = arith.addf %59, %69 : vector<1x1xf32>
    %71 = arith.select %62, %64, %70 : vector<1x1xi1>, vector<1x1xf32>
    %c0_27 = arith.constant 0 : index
    %c0_28 = arith.constant 0 : index
    %c0_29 = arith.constant 0 : index
    %72 = vector.load %arg9[%c0_27, %c0_28, %c0_29] : memref<1x1x1xf32, #tpu.memory_space<vmem>>, vector<1x1x1xf32>
    %73 = vector.shape_cast %72 : vector<1x1x1xf32> to vector<1x1xf32>
    %74 = vector.shape_cast %71 : vector<1x1xf32> to vector<1x1x1xf32>
    tpu.vector_store %arg9[%c0_27, %c0_28, %c0_29], %74 {strides = array<i32>} : memref<1x1x1xf32, #tpu.memory_space<vmem>>, vector<1x1x1xf32>,
    return
  }
  func.func @transform_0(%arg0: i32) -> (i32, i32, i32) {
    %c0_i32 = arith.constant 0 : i32
    %c0_i32_0 = arith.constant 0 : i32
    %c0_i32_1 = arith.constant 0 : i32
    return %arg0, %c0_i32, %c0_i32_0 : i32, i32, i32
  }
  func.func @transform_1(%arg0: i32) -> (i32, i32) {
    %c0_i32 = arith.constant 0 : i32
    %c0_i32_0 = arith.constant 0 : i32
    %c0_i32_1 = arith.constant 0 : i32
    return %c0_i32, %c0_i32_0 : i32, i32
  }
  func.func @transform_2(%arg0: i32) -> (i32, i32) {
    %c0_i32 = arith.constant 0 : i32
    %c0_i32_0 = arith.constant 0 : i32
    %c0_i32_1 = arith.constant 0 : i32
    return %c0_i32, %c0_i32_0 : i32, i32
  }
  func.func @transform_3(%arg0: i32) -> (i32, i32) {
    %c0_i32 = arith.constant 0 : i32
    %c0_i32_0 = arith.constant 0 : i32
    %c0_i32_1 = arith.constant 0 : i32
    return %c0_i32, %c0_i32_0 : i32, i32
  }
  func.func @transform_4(%arg0: i32) -> (i32, i32) {
    %c0_i32 = arith.constant 0 : i32
    %c0_i32_0 = arith.constant 0 : i32
    %c0_i32_1 = arith.constant 0 : i32
    return %c0_i32, %c0_i32_0 : i32, i32
  }
  func.func @transform_5(%arg0: i32) -> (i32, i32) {
    %c0_i32 = arith.constant 0 : i32
    %c0_i32_0 = arith.constant 0 : i32
    %c0_i32_1 = arith.constant 0 : i32
    return %c0_i32, %c0_i32_0 : i32, i32
  }
  func.func @transform_6(%arg0: i32) -> (i32, i32) {
    %c0_i32 = arith.constant 0 : i32
    %c0_i32_0 = arith.constant 0 : i32
    %c0_i32_1 = arith.constant 0 : i32
    return %c0_i32, %c0_i32_0 : i32, i32
  }
  func.func @transform_7(%arg0: i32) -> (i32, i32) {
    %c0_i32 = arith.constant 0 : i32
    %c0_i32_0 = arith.constant 0 : i32
    %c0_i32_1 = arith.constant 0 : i32
    return %c0_i32, %c0_i32_0 : i32, i32
  }
  func.func @transform_8(%arg0: i32) -> (i32, i32, i32) {
    %c0_i32 = arith.constant 0 : i32
    %c0_i32_0 = arith.constant 0 : i32
    %c0_i32_1 = arith.constant 0 : i32
    return %arg0, %c0_i32, %c0_i32_0 : i32, i32, i32
  }
}

</mosaic_0001>

<llo_original>
// kernel: criterion_forward.1
$region0: #{criterion_forward.1}
  #allocation0 [shape = 'u32[]', space=smem, size = 0x4, offset = 0x4, fixed_abs, tag = 'smem constant byte address 0x4 - core index']
  #allocation1 [shape = 'u32[144,128]{1,0:T(1,128)}', space=vmem, size = 0x12000, scoped, tag = 'internal scratch']
  #allocation2 [shape = 'f32[1,1]{1,0:T(1,128)S(1)}', space=vmem, size = 0x200, scoped, tag = 'scoped memory for criterion_forward.1']
  %s0 = inlined_call_operand.vmem [shape: f32[2,4,256], index: 0, kind: input, shape index: {}]
  %s1 = inlined_call_operand.hbm [shape: f32[256,1024], index: 1, kind: input, shape index: {}]
  %s2 = inlined_call_operand.vmem [shape: f32[32,4], index: 2, kind: input, shape index: {}]
  %s3 = inlined_call_operand.vmem [shape: f32[32,1], index: 3, kind: input, shape index: {}]
  %s4 = inlined_call_operand.vmem [shape: f32[32,32], index: 4, kind: input, shape index: {}]
  %s5 = inlined_call_operand.vmem [shape: f32[32,1], index: 5, kind: input, shape index: {}]
  %s6 = inlined_call_operand.vmem [shape: f32[32,1], index: 6, kind: input, shape index: {}]
  %s7 = inlined_call_operand.<no memory space> [shape: f32[1,1], index: 7, kind: input, shape index: {}]
  %s8 = inlined_call_operand.vmem [shape: f32[2,1,1], index: 8, kind: output, shape index: {}]
  %s9 = sld [smem:[#allocation0]]
  $region69: #{criterion_forward.1} parent=0
    _
  %s11 = ssub.s32 1, %s9
  %s12 = scalar_select 0, %s11, %s9
  %v13 = vstv %s7
  %14 = vst [vmem:[#allocation2] sm:$0x1] %v13
  $region1: #{criterion_forward.1} parent=0
    #allocation3 [shape = 'u8[1048576]{0}', space=vmem, size = 0x100000, scoped, tag = 'input window, operand 1, single buffered']
    #allocation4 [shape = 's32[2]{0}', space=sflag, size = 0x8, scoped, tag = 'scoped memory for criterion_forward.1']
    %15 = vsyncpa [#allocation4], 0
    loop: start=0, step=1, limit=4
    $region2: #{criterion_forward.1} parent=1 // loop_pre_header
      _
    $region3: #{criterion_forward.1} parent=1 // loop_header
      %s17 = sphi 0, %s21
      %p18 = scmp.ge.s32.totalorder %s17, 4
      %s27 = sphi 0, %s29
      %s30 = sphi 0, %s27
      %s31 = sphi 0, %s30
      %s47 = sphi 0, %s31
      %s51 = sphi 0, %s51
      %s53 = sphi 0, %s51
      %s54 = sphi 0, %s53
      %s68 = sphi 0, %s54
      %s72 = sphi 0, %s72
      %s74 = sphi 0, %s72
      %s75 = sphi 0, %s74
      %s89 = sphi 0, %s75
      %s93 = sphi 0, %s93
      %s95 = sphi 0, %s93
      %s96 = sphi 0, %s95
      %s110 = sphi 0, %s96
      %s114 = sphi 0, %s114
      %s116 = sphi 0, %s114
      %s117 = sphi 0, %s116
      %s131 = sphi 0, %s117
      %s135 = sphi 0, %s135
      %s137 = sphi 0, %s135
      %s138 = sphi 0, %s137
      %s152 = sphi 0, %s138
      %s156 = sphi 0, %s156
      %s158 = sphi 0, %s156
      %s159 = sphi 0, %s158
      %s173 = sphi 0, %s159
      %s177 = sphi 0, %s177
      %s179 = sphi 0, %s177
      %s180 = sphi 0, %s179
      %s194 = sphi 0, %s180
      %s200 = sphi 0, %s202
      %s203 = sphi 0, %s200
      %s204 = sphi 0, %s203
      %s220 = sphi 0, %s204
    $region4: #{criterion_forward.1} parent=1 // loop_header_branch
      %20 = sbr.rel (%p18) target = $region8
    $region5: #{criterion_forward.1} parent=1 // loop_body
      %s22 = ssub.s32 %s17, 1
      %s23 = ssub.s32 %s17, 2
      %s24 = sadd.s32 %s17, 1
      %s25 = ssub.s32 %s17, %s24
      %p26 = scmp.eq.s32.totalorder %s25, 0
      %s28 = sadd.s32 %s27, 1
      %s29 = scalar_select %p26, %s27, %s28
      %p32 = pneg %p26
      %p33 = scmp.eq.s32.totalorder %s17, 1
      %p34 = por %p32, %p33
      %p35 = scmp.ne.s32.totalorder %s27, %s30
      %p36 = scmp.eq.s32.totalorder %s17, 0
      %p37 = por %p35, %p36
      %p38 = scmp.ne.s32.totalorder %s27, %s30
      %p39 = scmp.eq.s32.totalorder %s22, 1
      %p40 = por %p38, %p39
      %p41 = scmp.ne.s32.totalorder %s30, %s31
      %p42 = scmp.eq.s32.totalorder %s22, 0
      %p43 = por %p41, %p42
      %p44 = scmp.ne.s32.totalorder %s30, %s31
      %p45 = scmp.eq.s32.totalorder %s23, 1
      %p46 = por %p44, %p45
      %p48 = scmp.ne.s32.totalorder %s31, %s47
      %p49 = scmp.eq.s32.totalorder %s23, 0
      %p50 = por %p48, %p49
      %s52 = sadd.s32 %s51, 1
      %p55 = scmp.eq.s32.totalorder %s17, 1
      %p56 = scmp.ne.s32.totalorder %s51, %s53
      %p57 = scmp.eq.s32.totalorder %s17, 0
      %p58 = por %p56, %p57
      %p59 = scmp.ne.s32.totalorder %s51, %s53
      %p60 = scmp.eq.s32.totalorder %s22, 1
      %p61 = por %p59, %p60
      %p62 = scmp.ne.s32.totalorder %s53, %s54
      %p63 = scmp.eq.s32.totalorder %s22, 0
      %p64 = por %p62, %p63
      %p65 = scmp.ne.s32.totalorder %s53, %s54
      %p66 = scmp.eq.s32.totalorder %s23, 1
      %p67 = por %p65, %p66
      %p69 = scmp.ne.s32.totalorder %s54, %s68
      %p70 = scmp.eq.s32.totalorder %s23, 0
      %p71 = por %p69, %p70
      %s73 = sadd.s32 %s72, 1
      %p76 = scmp.eq.s32.totalorder %s17, 1
      %p77 = scmp.ne.s32.totalorder %s72, %s74
      %p78 = scmp.eq.s32.totalorder %s17, 0
      %p79 = por %p77, %p78
      %p80 = scmp.ne.s32.totalorder %s72, %s74
      %p81 = scmp.eq.s32.totalorder %s22, 1
      %p82 = por %p80, %p81
      %p83 = scmp.ne.s32.totalorder %s74, %s75
      %p84 = scmp.eq.s32.totalorder %s22, 0
      %p85 = por %p83, %p84
      %p86 = scmp.ne.s32.totalorder %s74, %s75
      %p87 = scmp.eq.s32.totalorder %s23, 1
      %p88 = por %p86, %p87
      %p90 = scmp.ne.s32.totalorder %s75, %s89
      %p91 = scmp.eq.s32.totalorder %s23, 0
      %p92 = por %p90, %p91
      %s94 = sadd.s32 %s93, 1
      %p97 = scmp.eq.s32.totalorder %s17, 1
      %p98 = scmp.ne.s32.totalorder %s93, %s95
      %p99 = scmp.eq.s32.totalorder %s17, 0
      %p100 = por %p98, %p99
      %p101 = scmp.ne.s32.totalorder %s93, %s95
      %p102 = scmp.eq.s32.totalorder %s22, 1
      %p103 = por %p101, %p102
      %p104 = scmp.ne.s32.totalorder %s95, %s96
      %p105 = scmp.eq.s32.totalorder %s22, 0
      %p106 = por %p104, %p105
      %p107 = scmp.ne.s32.totalorder %s95, %s96
      %p108 = scmp.eq.s32.totalorder %s23, 1
      %p109 = por %p107, %p108
      %p111 = scmp.ne.s32.totalorder %s96, %s110
      %p112 = scmp.eq.s32.totalorder %s23, 0
      %p113 = por %p111, %p112
      %s115 = sadd.s32 %s114, 1
      %p118 = scmp.eq.s32.totalorder %s17, 1
      %p119 = scmp.ne.s32.totalorder %s114, %s116
      %p120 = scmp.eq.s32.totalorder %s17, 0
      %p121 = por %p119, %p120
      %p122 = scmp.ne.s32.totalorder %s114, %s116
      %p123 = scmp.eq.s32.totalorder %s22, 1
      %p124 = por %p122, %p123
      %p125 = scmp.ne.s32.totalorder %s116, %s117
      %p126 = scmp.eq.s32.totalorder %s22, 0
      %p127 = por %p125, %p126
      %p128 = scmp.ne.s32.totalorder %s116, %s117
      %p129 = scmp.eq.s32.totalorder %s23, 1
      %p130 = por %p128, %p129
      %p132 = scmp.ne.s32.totalorder %s117, %s131
      %p133 = scmp.eq.s32.totalorder %s23, 0
      %p134 = por %p132, %p133
      %s136 = sadd.s32 %s135, 1
      %p139 = scmp.eq.s32.totalorder %s17, 1
      %p140 = scmp.ne.s32.totalorder %s135, %s137
      %p141 = scmp.eq.s32.totalorder %s17, 0
      %p142 = por %p140, %p141
      %p143 = scmp.ne.s32.totalorder %s135, %s137
      %p144 = scmp.eq.s32.totalorder %s22, 1
      %p145 = por %p143, %p144
      %p146 = scmp.ne.s32.totalorder %s137, %s138
      %p147 = scmp.eq.s32.totalorder %s22, 0
      %p148 = por %p146, %p147
      %p149 = scmp.ne.s32.totalorder %s137, %s138
      %p150 = scmp.eq.s32.totalorder %s23, 1
      %p151 = por %p149, %p150
      %p153 = scmp.ne.s32.totalorder %s138, %s152
      %p154 = scmp.eq.s32.totalorder %s23, 0
      %p155 = por %p153, %p154
      %s157 = sadd.s32 %s156, 1
      %p160 = scmp.eq.s32.totalorder %s17, 1
      %p161 = scmp.ne.s32.totalorder %s156, %s158
      %p162 = scmp.eq.s32.totalorder %s17, 0
      %p163 = por %p161, %p162
      %p164 = scmp.ne.s32.totalorder %s156, %s158
      %p165 = scmp.eq.s32.totalorder %s22, 1
      %p166 = por %p164, %p165
      %p167 = scmp.ne.s32.totalorder %s158, %s159
      %p168 = scmp.eq.s32.totalorder %s22, 0
      %p169 = por %p167, %p168
      %p170 = scmp.ne.s32.totalorder %s158, %s159
      %p171 = scmp.eq.s32.totalorder %s23, 1
      %p172 = por %p170, %p171
      %p174 = scmp.ne.s32.totalorder %s159, %s173
      %p175 = scmp.eq.s32.totalorder %s23, 0
      %p176 = por %p174, %p175
      %s178 = sadd.s32 %s177, 1
      %p181 = scmp.eq.s32.totalorder %s17, 1
      %p182 = scmp.ne.s32.totalorder %s177, %s179
      %p183 = scmp.eq.s32.totalorder %s17, 0
      %p184 = por %p182, %p183
      %p185 = scmp.ne.s32.totalorder %s177, %s179
      %p186 = scmp.eq.s32.totalorder %s22, 1
      %p187 = por %p185, %p186
      %p188 = scmp.ne.s32.totalorder %s179, %s180
      %p189 = scmp.eq.s32.totalorder %s22, 0
      %p190 = por %p188, %p189
      %p191 = scmp.ne.s32.totalorder %s179, %s180
      %p192 = scmp.eq.s32.totalorder %s23, 1
      %p193 = por %p191, %p192
      %p195 = scmp.ne.s32.totalorder %s180, %s194
      %p196 = scmp.eq.s32.totalorder %s23, 0
      %p197 = por %p195, %p196
      %s198 = ssub.s32 %s17, %s24
      %p199 = scmp.eq.s32.totalorder %s198, 0
      %s201 = sadd.s32 %s200, 1
      %s202 = scalar_select %p199, %s200, %s201
      %p205 = pneg %p199
      %p206 = scmp.eq.s32.totalorder %s17, 1
      %p207 = por %p205, %p206
      %p208 = scmp.ne.s32.totalorder %s200, %s203
      %p209 = scmp.eq.s32.totalorder %s17, 0
      %p210 = por %p208, %p209
      %p211 = scmp.ne.s32.totalorder %s200, %s203
      %p212 = scmp.eq.s32.totalorder %s22, 1
      %p213 = por %p211, %p212
      %p214 = scmp.ne.s32.totalorder %s203, %s204
      %p215 = scmp.eq.s32.totalorder %s22, 0
      %p216 = por %p214, %p215
      %p217 = scmp.ne.s32.totalorder %s203, %s204
      %p218 = scmp.eq.s32.totalorder %s23, 1
      %p219 = por %p217, %p218
      %p221 = scmp.ne.s32.totalorder %s204, %s220
      %p222 = scmp.eq.s32.totalorder %s23, 0
      %p223 = por %p221, %p222
      %p224 = scmp.le.s32.totalorder 1, %s17
      %p225 = scmp.lt.s32.totalorder %s17, 3
      %p226 = pnand %p224, %p225
      %p227 = pneg %p226
      // Predicated region
      $region9: #{criterion_forward.1} parent=5 // pred_check
        _
      $region10: #{criterion_forward.1} parent=5 // pred_check_branch
        %229 = sbr.rel (%p226) target = $region12
      $region11: #{criterion_forward.1} parent=5 // pred_region
        %s230 = ssub.s32 %s17, 1
        // Predicated region
        $region13: #{criterion_forward.1} parent=11 // pred_check
          %p231 = pneg %p64
        $region14: #{criterion_forward.1} parent=11 // pred_check_branch
          %233 = sbr.rel (%p231) target = $region16
        $region15: #{criterion_forward.1} parent=11 // pred_region
          %s235 = ssub.s32 32768, 32768
          %236 = vsyncadd [#allocation4], %s235
          %s237 = sshll.u32 [#allocation3], 4
          %s238 = int_to_ptr.vmem [resolvable:$true] %s237
          %243 = dma.hbm_to_vmem [thread:$0]  %s1, 32768, %s238, [#allocation4], 1024, 1024, 64
        $region16: #{criterion_forward.1} parent=11 // pred_fallthru
          _
        // Predicated region
        $region17: #{criterion_forward.1} parent=11 // pred_check
          %p244 = pneg %p85
        $region18: #{criterion_forward.1} parent=11 // pred_check_branch
          %246 = sbr.rel (%p244) target = $region20
        $region19: #{criterion_forward.1} parent=11 // pred_region
          _
        $region20: #{criterion_forward.1} parent=11 // pred_fallthru
          _
        // Predicated region
        $region21: #{criterion_forward.1} parent=11 // pred_check
          %p247 = pneg %p106
        $region22: #{criterion_forward.1} parent=11 // pred_check_branch
          %249 = sbr.rel (%p247) target = $region24
        $region23: #{criterion_forward.1} parent=11 // pred_region
          _
        $region24: #{criterion_forward.1} parent=11 // pred_fallthru
          _
        // Predicated region
        $region25: #{criterion_forward.1} parent=11 // pred_check
          %p250 = pneg %p127
        $region26: #{criterion_forward.1} parent=11 // pred_check_branch
          %252 = sbr.rel (%p250) target = $region28
        $region27: #{criterion_forward.1} parent=11 // pred_region
          _
        $region28: #{criterion_forward.1} parent=11 // pred_fallthru
          _
        // Predicated region
        $region29: #{criterion_forward.1} parent=11 // pred_check
          %p253 = pneg %p148
        $region30: #{criterion_forward.1} parent=11 // pred_check_branch
          %255 = sbr.rel (%p253) target = $region32
        $region31: #{criterion_forward.1} parent=11 // pred_region
          _
        $region32: #{criterion_forward.1} parent=11 // pred_fallthru
          _
        // Predicated region
        $region33: #{criterion_forward.1} parent=11 // pred_check
          %p256 = pneg %p169
        $region34: #{criterion_forward.1} parent=11 // pred_check_branch
          %258 = sbr.rel (%p256) target = $region36
        $region35: #{criterion_forward.1} parent=11 // pred_region
          _
        $region36: #{criterion_forward.1} parent=11 // pred_fallthru
          _
        // Predicated region
        $region37: #{criterion_forward.1} parent=11 // pred_check
          %p259 = pneg %p190
        $region38: #{criterion_forward.1} parent=11 // pred_check_branch
          %261 = sbr.rel (%p259) target = $region40
        $region39: #{criterion_forward.1} parent=11 // pred_region
          _
        $region40: #{criterion_forward.1} parent=11 // pred_fallthru
          _
      $region12: #{criterion_forward.1} parent=5 // pred_fallthru
        _
      %p262 = scmp.lt.s32.totalorder %s17, 2
      // Predicated region
      $region41: #{criterion_forward.1} parent=5 // pred_check
        %p263 = pneg %p262
      $region42: #{criterion_forward.1} parent=5 // pred_check_branch
        %265 = sbr.rel (%p263) target = $region44
      $region43: #{criterion_forward.1} parent=5 // pred_region
        // Predicated region
        $region45: #{criterion_forward.1} parent=43 // pred_check
          %p266 = pneg %p37
        $region46: #{criterion_forward.1} parent=43 // pred_check_branch
          %268 = sbr.rel (%p266) target = $region48
        $region47: #{criterion_forward.1} parent=43 // pred_region
          %p269 = scmp.lt.s32.totalorder %s17, 1
          %s270 = scalar_select %p269, %s17, 1
          %s271 = smul.addr %s270, 2
          %s272 = smul.addr %s271, 4
          %s273 = scalar_lea.vmem %s0, %s272
        $region48: #{criterion_forward.1} parent=43 // pred_fallthru
          _
      $region44: #{criterion_forward.1} parent=5 // pred_fallthru
        _
      %p274 = scmp.le.s32.totalorder 1, %s17
      %p275 = scmp.lt.s32.totalorder %s17, 3
      %p276 = pnand %p274, %p275
      %p277 = pneg %p276
      // Predicated region
      $region49: #{criterion_forward.1} parent=5 // pred_check
        _
      $region50: #{criterion_forward.1} parent=5 // pred_check_branch
        %279 = sbr.rel (%p276) target = $region52
      $region51: #{criterion_forward.1} parent=5 // pred_region
        %s280 = ssub.s32 %s17, 1
        // Predicated region
        $region53: #{criterion_forward.1} parent=51 // pred_check
          %p281 = pneg %p64
        $region54: #{criterion_forward.1} parent=51 // pred_check_branch
          %283 = sbr.rel (%p281) target = $region56
        $region55: #{criterion_forward.1} parent=51 // pred_region
          %284 = dma.done [#allocation4], 32768
        $region56: #{criterion_forward.1} parent=51 // pred_fallthru
          _
        %p285 = scmp.lt.s32.totalorder %s22, 1
        %s286 = scalar_select %p285, %s22, 1
        %s287 = smul.addr %s286, 2
        %s288 = smul.addr %s287, 4
        %s289 = scalar_lea.vmem %s0, %s288
        %p290 = pneg %p43
        %p291 = pneg %p40
        %p292 = pneg %p64
        %p293 = pneg %p61
        %p294 = pneg %p85
        %p295 = pneg %p82
        %p296 = pneg %p106
        %p297 = pneg %p103
        %p298 = pneg %p127
        %p299 = pneg %p124
        %p300 = pneg %p148
        %p301 = pneg %p145
        %p302 = pneg %p169
        %p303 = pneg %p166
        %p304 = pneg %p190
        %p305 = pneg %p187
        %p306 = pneg %p216
        %p307 = pneg %p213
        %p308 = scmp.lt.s32.totalorder %s22, 1
        %s309 = scalar_select %p308, %s22, 1
        %s310 = scalar_lea.vmem %s8, %s309
        %p311 = scmp.lt.s32.totalorder %s22, 1
        %s312 = scalar_select %p311, %s22, 1
        %s313 = smul.addr %s312, 2
        %s314 = smul.addr %s313, 4
        %s315 = scalar_lea.vmem %s0, %s314
        %p316 = scmp.lt.s32.totalorder %s22, 1
        %s317 = scalar_select %p316, %s22, 1
        %s318 = scalar_lea.vmem %s8, %s317
        %v319 = vld [vmem:[%s315] sm:$0xff]
        %v320 = vld [vmem:[#allocation3] sm:$0xff]
        %v321 = vld [vmem:[#allocation3 + $0x8] sm:$0xff]
        %v322 = vld [vmem:[#allocation3 + $0x10] sm:$0xff]
        %v323 = vld [vmem:[#allocation3 + $0x18] sm:$0xff]
        %v324 = vld [vmem:[#allocation3 + $0x20] sm:$0xff]
        %v325 = vld [vmem:[#allocation3 + $0x28] sm:$0xff]
        %v326 = vld [vmem:[#allocation3 + $0x30] sm:$0xff]
        %v327 = vld [vmem:[#allocation3 + $0x38] sm:$0xff]
        %v328 = vld [vmem:[#allocation3 + $0x40] sm:$0xff]
        %v329 = vld [vmem:[#allocation3 + $0x48] sm:$0xff]
        %v330 = vld [vmem:[#allocation3 + $0x50] sm:$0xff]
        %v331 = vld [vmem:[#allocation3 + $0x58] sm:$0xff]
        %v332 = vld [vmem:[#allocation3 + $0x60] sm:$0xff]
        %v333 = vld [vmem:[#allocation3 + $0x68] sm:$0xff]
        %v334 = vld [vmem:[#allocation3 + $0x70] sm:$0xff]
        %v335 = vld [vmem:[#allocation3 + $0x78] sm:$0xff]
        %v336 = vld [vmem:[#allocation3 + $0x80] sm:$0xff]
        %v337 = vld [vmem:[#allocation3 + $0x88] sm:$0xff]
        %v338 = vld [vmem:[#allocation3 + $0x90] sm:$0xff]
        %v339 = vld [vmem:[#allocation3 + $0x98] sm:$0xff]
        %v340 = vld [vmem:[#allocation3 + $0xa0] sm:$0xff]
        %v341 = vld [vmem:[#allocation3 + $0xa8] sm:$0xff]
        %v342 = vld [vmem:[#allocation3 + $0xb0] sm:$0xff]
        %v343 = vld [vmem:[#allocation3 + $0xb8] sm:$0xff]
        %v344 = vld [vmem:[#allocation3 + $0xc0] sm:$0xff]
        %v345 = vld [vmem:[#allocation3 + $0xc8] sm:$0xff]
        %v346 = vld [vmem:[#allocation3 + $0xd0] sm:$0xff]
        %v347 = vld [vmem:[#allocation3 + $0xd8] sm:$0xff]
        %v348 = vld [vmem:[#allocation3 + $0xe0] sm:$0xff]
        %v349 = vld [vmem:[#allocation3 + $0xe8] sm:$0xff]
        %v350 = vld [vmem:[#allocation3 + $0xf0] sm:$0xff]
        %v351 = vld [vmem:[#allocation3 + $0xf8] sm:$0xff]
        %v352 = vld [vmem:[#allocation3 + $0x100] sm:$0xff]
        %v353 = vld [vmem:[#allocation3 + $0x108] sm:$0xff]
        %v354 = vld [vmem:[#allocation3 + $0x110] sm:$0xff]
        %v355 = vld [vmem:[#allocation3 + $0x118] sm:$0xff]
        %v356 = vld [vmem:[#allocation3 + $0x120] sm:$0xff]
        %v357 = vld [vmem:[#allocation3 + $0x128] sm:$0xff]
        %v358 = vld [vmem:[#allocation3 + $0x130] sm:$0xff]
        %v359 = vld [vmem:[#allocation3 + $0x138] sm:$0xff]
        %v360 = vld [vmem:[#allocation3 + $0x140] sm:$0xff]
        %v361 = vld [vmem:[#allocation3 + $0x148] sm:$0xff]
        %v362 = vld [vmem:[#allocation3 + $0x150] sm:$0xff]
        %v363 = vld [vmem:[#allocation3 + $0x158] sm:$0xff]
        %v364 = vld [vmem:[#allocation3 + $0x160] sm:$0xff]
        %v365 = vld [vmem:[#allocation3 + $0x168] sm:$0xff]
        %v366 = vld [vmem:[#allocation3 + $0x170] sm:$0xff]
        %v367 = vld [vmem:[#allocation3 + $0x178] sm:$0xff]
        %v368 = vld [vmem:[#allocation3 + $0x180] sm:$0xff]
        %v369 = vld [vmem:[#allocation3 + $0x188] sm:$0xff]
        %v370 = vld [vmem:[#allocation3 + $0x190] sm:$0xff]
        %v371 = vld [vmem:[#allocation3 + $0x198] sm:$0xff]
        %v372 = vld [vmem:[#allocation3 + $0x1a0] sm:$0xff]
        %v373 = vld [vmem:[#allocation3 + $0x1a8] sm:$0xff]
        %v374 = vld [vmem:[#allocation3 + $0x1b0] sm:$0xff]
        %v375 = vld [vmem:[#allocation3 + $0x1b8] sm:$0xff]
        %v376 = vld [vmem:[#allocation3 + $0x1c0] sm:$0xff]
        %v377 = vld [vmem:[#allocation3 + $0x1c8] sm:$0xff]
        %v378 = vld [vmem:[#allocation3 + $0x1d0] sm:$0xff]
        %v379 = vld [vmem:[#allocation3 + $0x1d8] sm:$0xff]
        %v380 = vld [vmem:[#allocation3 + $0x1e0] sm:$0xff]
        %v381 = vld [vmem:[#allocation3 + $0x1e8] sm:$0xff]
        %v382 = vld [vmem:[#allocation3 + $0x1f0] sm:$0xff]
        %v383 = vld [vmem:[#allocation3 + $0x1f8] sm:$0xff]
        %v384 = vld [vmem:[#allocation3 + $0x200] sm:$0xff]
        %v385 = vld [vmem:[#allocation3 + $0x208] sm:$0xff]
        %v386 = vld [vmem:[#allocation3 + $0x210] sm:$0xff]
        %v387 = vld [vmem:[#allocation3 + $0x218] sm:$0xff]
        %v388 = vld [vmem:[#allocation3 + $0x220] sm:$0xff]
        %v389 = vld [vmem:[#allocation3 + $0x228] sm:$0xff]
        %v390 = vld [vmem:[#allocation3 + $0x230] sm:$0xff]
        %v391 = vld [vmem:[#allocation3 + $0x238] sm:$0xff]
        %v392 = vld [vmem:[#allocation3 + $0x240] sm:$0xff]
        %v393 = vld [vmem:[#allocation3 + $0x248] sm:$0xff]
        %v394 = vld [vmem:[#allocation3 + $0x250] sm:$0xff]
        %v395 = vld [vmem:[#allocation3 + $0x258] sm:$0xff]
        %v396 = vld [vmem:[#allocation3 + $0x260] sm:$0xff]
        %v397 = vld [vmem:[#allocation3 + $0x268] sm:$0xff]
        %v398 = vld [vmem:[#allocation3 + $0x270] sm:$0xff]
        %v399 = vld [vmem:[#allocation3 + $0x278] sm:$0xff]
        %v400 = vld [vmem:[#allocation3 + $0x280] sm:$0xff]
        %v401 = vld [vmem:[#allocation3 + $0x288] sm:$0xff]
        %v402 = vld [vmem:[#allocation3 + $0x290] sm:$0xff]
        %v403 = vld [vmem:[#allocation3 + $0x298] sm:$0xff]
        %v404 = vld [vmem:[#allocation3 + $0x2a0] sm:$0xff]
        %v405 = vld [vmem:[#allocation3 + $0x2a8] sm:$0xff]
        %v406 = vld [vmem:[#allocation3 + $0x2b0] sm:$0xff]
        %v407 = vld [vmem:[#allocation3 + $0x2b8] sm:$0xff]
        %v408 = vld [vmem:[#allocation3 + $0x2c0] sm:$0xff]
        %v409 = vld [vmem:[#allocation3 + $0x2c8] sm:$0xff]
        %v410 = vld [vmem:[#allocation3 + $0x2d0] sm:$0xff]
        %v411 = vld [vmem:[#allocation3 + $0x2d8] sm:$0xff]
        %v412 = vld [vmem:[#allocation3 + $0x2e0] sm:$0xff]
        %v413 = vld [vmem:[#allocation3 + $0x2e8] sm:$0xff]
        %v414 = vld [vmem:[#allocation3 + $0x2f0] sm:$0xff]
        %v415 = vld [vmem:[#allocation3 + $0x2f8] sm:$0xff]
        %v416 = vld [vmem:[#allocation3 + $0x300] sm:$0xff]
        %v417 = vld [vmem:[#allocation3 + $0x308] sm:$0xff]
        %v418 = vld [vmem:[#allocation3 + $0x310] sm:$0xff]
        %v419 = vld [vmem:[#allocation3 + $0x318] sm:$0xff]
        %v420 = vld [vmem:[#allocation3 + $0x320] sm:$0xff]
        %v421 = vld [vmem:[#allocation3 + $0x328] sm:$0xff]
        %v422 = vld [vmem:[#allocation3 + $0x330] sm:$0xff]
        %v423 = vld [vmem:[#allocation3 + $0x338] sm:$0xff]
        %v424 = vld [vmem:[#allocation3 + $0x340] sm:$0xff]
        %v425 = vld [vmem:[#allocation3 + $0x348] sm:$0xff]
        %v426 = vld [vmem:[#allocation3 + $0x350] sm:$0xff]
        %v427 = vld [vmem:[#allocation3 + $0x358] sm:$0xff]
        %v428 = vld [vmem:[#allocation3 + $0x360] sm:$0xff]
        %v429 = vld [vmem:[#allocation3 + $0x368] sm:$0xff]
        %v430 = vld [vmem:[#allocation3 + $0x370] sm:$0xff]
        %v431 = vld [vmem:[#allocation3 + $0x378] sm:$0xff]
        %v432 = vld [vmem:[#allocation3 + $0x380] sm:$0xff]
        %v433 = vld [vmem:[#allocation3 + $0x388] sm:$0xff]
        %v434 = vld [vmem:[#allocation3 + $0x390] sm:$0xff]
        %v435 = vld [vmem:[#allocation3 + $0x398] sm:$0xff]
        %v436 = vld [vmem:[#allocation3 + $0x3a0] sm:$0xff]
        %v437 = vld [vmem:[#allocation3 + $0x3a8] sm:$0xff]
        %v438 = vld [vmem:[#allocation3 + $0x3b0] sm:$0xff]
        %v439 = vld [vmem:[#allocation3 + $0x3b8] sm:$0xff]
        %v440 = vld [vmem:[#allocation3 + $0x3c0] sm:$0xff]
        %v441 = vld [vmem:[#allocation3 + $0x3c8] sm:$0xff]
        %v442 = vld [vmem:[#allocation3 + $0x3d0] sm:$0xff]
        %v443 = vld [vmem:[#allocation3 + $0x3d8] sm:$0xff]
        %v444 = vld [vmem:[#allocation3 + $0x3e0] sm:$0xff]
        %v445 = vld [vmem:[#allocation3 + $0x3e8] sm:$0xff]
        %v446 = vld [vmem:[#allocation3 + $0x3f0] sm:$0xff]
        %v447 = vld [vmem:[#allocation3 + $0x3f8] sm:$0xff]
        %v448 = vld [vmem:[#allocation3 + $0x400] sm:$0xff]
        %v449 = vld [vmem:[#allocation3 + $0x408] sm:$0xff]
        %v450 = vld [vmem:[#allocation3 + $0x410] sm:$0xff]
        %v451 = vld [vmem:[#allocation3 + $0x418] sm:$0xff]
        %v452 = vld [vmem:[#allocation3 + $0x420] sm:$0xff]
        %v453 = vld [vmem:[#allocation3 + $0x428] sm:$0xff]
        %v454 = vld [vmem:[#allocation3 + $0x430] sm:$0xff]
        %v455 = vld [vmem:[#allocation3 + $0x438] sm:$0xff]
        %v456 = vld [vmem:[#allocation3 + $0x440] sm:$0xff]
        %v457 = vld [vmem:[#allocation3 + $0x448] sm:$0xff]
        %v458 = vld [vmem:[#allocation3 + $0x450] sm:$0xff]
        %v459 = vld [vmem:[#allocation3 + $0x458] sm:$0xff]
        %v460 = vld [vmem:[#allocation3 + $0x460] sm:$0xff]
        %v461 = vld [vmem:[#allocation3 + $0x468] sm:$0xff]
        %v462 = vld [vmem:[#allocation3 + $0x470] sm:$0xff]
        %v463 = vld [vmem:[#allocation3 + $0x478] sm:$0xff]
        %v464 = vld [vmem:[#allocation3 + $0x480] sm:$0xff]
        %v465 = vld [vmem:[#allocation3 + $0x488] sm:$0xff]
        %v466 = vld [vmem:[#allocation3 + $0x490] sm:$0xff]
        %v467 = vld [vmem:[#allocation3 + $0x498] sm:$0xff]
        %v468 = vld [vmem:[#allocation3 + $0x4a0] sm:$0xff]
        %v469 = vld [vmem:[#allocation3 + $0x4a8] sm:$0xff]
        %v470 = vld [vmem:[#allocation3 + $0x4b0] sm:$0xff]
        %v471 = vld [vmem:[#allocation3 + $0x4b8] sm:$0xff]
        %v472 = vld [vmem:[#allocation3 + $0x4c0] sm:$0xff]
        %v473 = vld [vmem:[#allocation3 + $0x4c8] sm:$0xff]
        %v474 = vld [vmem:[#allocation3 + $0x4d0] sm:$0xff]
        %v475 = vld [vmem:[#allocation3 + $0x4d8] sm:$0xff]
        %v476 = vld [vmem:[#allocation3 + $0x4e0] sm:$0xff]
        %v477 = vld [vmem:[#allocation3 + $0x4e8] sm:$0xff]
        %v478 = vld [vmem:[#allocation3 + $0x4f0] sm:$0xff]
        %v479 = vld [vmem:[#allocation3 + $0x4f8] sm:$0xff]
        %v480 = vld [vmem:[#allocation3 + $0x500] sm:$0xff]
        %v481 = vld [vmem:[#allocation3 + $0x508] sm:$0xff]
        %v482 = vld [vmem:[#allocation3 + $0x510] sm:$0xff]
        %v483 = vld [vmem:[#allocation3 + $0x518] sm:$0xff]
        %v484 = vld [vmem:[#allocation3 + $0x520] sm:$0xff]
        %v485 = vld [vmem:[#allocation3 + $0x528] sm:$0xff]
        %v486 = vld [vmem:[#allocation3 + $0x530] sm:$0xff]
        %v487 = vld [vmem:[#allocation3 + $0x538] sm:$0xff]
        %v488 = vld [vmem:[#allocation3 + $0x540] sm:$0xff]
        %v489 = vld [vmem:[#allocation3 + $0x548] sm:$0xff]
        %v490 = vld [vmem:[#allocation3 + $0x550] sm:$0xff]
        %v491 = vld [vmem:[#allocation3 + $0x558] sm:$0xff]
        %v492 = vld [vmem:[#allocation3 + $0x560] sm:$0xff]
        %v493 = vld [vmem:[#allocation3 + $0x568] sm:$0xff]
        %v494 = vld [vmem:[#allocation3 + $0x570] sm:$0xff]
        %v495 = vld [vmem:[#allocation3 + $0x578] sm:$0xff]
        %v496 = vld [vmem:[#allocation3 + $0x580] sm:$0xff]
        %v497 = vld [vmem:[#allocation3 + $0x588] sm:$0xff]
        %v498 = vld [vmem:[#allocation3 + $0x590] sm:$0xff]
        %v499 = vld [vmem:[#allocation3 + $0x598] sm:$0xff]
        %v500 = vld [vmem:[#allocation3 + $0x5a0] sm:$0xff]
        %v501 = vld [vmem:[#allocation3 + $0x5a8] sm:$0xff]
        %v502 = vld [vmem:[#allocation3 + $0x5b0] sm:$0xff]
        %v503 = vld [vmem:[#allocation3 + $0x5b8] sm:$0xff]
        %v504 = vld [vmem:[#allocation3 + $0x5c0] sm:$0xff]
        %v505 = vld [vmem:[#allocation3 + $0x5c8] sm:$0xff]
        %v506 = vld [vmem:[#allocation3 + $0x5d0] sm:$0xff]
        %v507 = vld [vmem:[#allocation3 + $0x5d8] sm:$0xff]
        %v508 = vld [vmem:[#allocation3 + $0x5e0] sm:$0xff]
        %v509 = vld [vmem:[#allocation3 + $0x5e8] sm:$0xff]
        %v510 = vld [vmem:[#allocation3 + $0x5f0] sm:$0xff]
        %v511 = vld [vmem:[#allocation3 + $0x5f8] sm:$0xff]
        %v512 = vld [vmem:[#allocation3 + $0x600] sm:$0xff]
        %v513 = vld [vmem:[#allocation3 + $0x608] sm:$0xff]
        %v514 = vld [vmem:[#allocation3 + $0x610] sm:$0xff]
        %v515 = vld [vmem:[#allocation3 + $0x618] sm:$0xff]
        %v516 = vld [vmem:[#allocation3 + $0x620] sm:$0xff]
        %v517 = vld [vmem:[#allocation3 + $0x628] sm:$0xff]
        %v518 = vld [vmem:[#allocation3 + $0x630] sm:$0xff]
        %v519 = vld [vmem:[#allocation3 + $0x638] sm:$0xff]
        %v520 = vld [vmem:[#allocation3 + $0x640] sm:$0xff]
        %v521 = vld [vmem:[#allocation3 + $0x648] sm:$0xff]
        %v522 = vld [vmem:[#allocation3 + $0x650] sm:$0xff]
        %v523 = vld [vmem:[#allocation3 + $0x658] sm:$0xff]
        %v524 = vld [vmem:[#allocation3 + $0x660] sm:$0xff]
        %v525 = vld [vmem:[#allocation3 + $0x668] sm:$0xff]
        %v526 = vld [vmem:[#allocation3 + $0x670] sm:$0xff]
        %v527 = vld [vmem:[#allocation3 + $0x678] sm:$0xff]
        %v528 = vld [vmem:[#allocation3 + $0x680] sm:$0xff]
        %v529 = vld [vmem:[#allocation3 + $0x688] sm:$0xff]
        %v530 = vld [vmem:[#allocation3 + $0x690] sm:$0xff]
        %v531 = vld [vmem:[#allocation3 + $0x698] sm:$0xff]
        %v532 = vld [vmem:[#allocation3 + $0x6a0] sm:$0xff]
        %v533 = vld [vmem:[#allocation3 + $0x6a8] sm:$0xff]
        %v534 = vld [vmem:[#allocation3 + $0x6b0] sm:$0xff]
        %v535 = vld [vmem:[#allocation3 + $0x6b8] sm:$0xff]
        %v536 = vld [vmem:[#allocation3 + $0x6c0] sm:$0xff]
        %v537 = vld [vmem:[#allocation3 + $0x6c8] sm:$0xff]
        %v538 = vld [vmem:[#allocation3 + $0x6d0] sm:$0xff]
        %v539 = vld [vmem:[#allocation3 + $0x6d8] sm:$0xff]
        %v540 = vld [vmem:[#allocation3 + $0x6e0] sm:$0xff]
        %v541 = vld [vmem:[#allocation3 + $0x6e8] sm:$0xff]
        %v542 = vld [vmem:[#allocation3 + $0x6f0] sm:$0xff]
        %v543 = vld [vmem:[#allocation3 + $0x6f8] sm:$0xff]
        %v544 = vld [vmem:[#allocation3 + $0x700] sm:$0xff]
        %v545 = vld [vmem:[#allocation3 + $0x708] sm:$0xff]
        %v546 = vld [vmem:[#allocation3 + $0x710] sm:$0xff]
        %v547 = vld [vmem:[#allocation3 + $0x718] sm:$0xff]
        %v548 = vld [vmem:[#allocation3 + $0x720] sm:$0xff]
        %v549 = vld [vmem:[#allocation3 + $0x728] sm:$0xff]
        %v550 = vld [vmem:[#allocation3 + $0x730] sm:$0xff]
        %v551 = vld [vmem:[#allocation3 + $0x738] sm:$0xff]
        %v552 = vld [vmem:[#allocation3 + $0x740] sm:$0xff]
        %v553 = vld [vmem:[#allocation3 + $0x748] sm:$0xff]
        %v554 = vld [vmem:[#allocation3 + $0x750] sm:$0xff]
        %v555 = vld [vmem:[#allocation3 + $0x758] sm:$0xff]
        %v556 = vld [vmem:[#allocation3 + $0x760] sm:$0xff]
        %v557 = vld [vmem:[#allocation3 + $0x768] sm:$0xff]
        %v558 = vld [vmem:[#allocation3 + $0x770] sm:$0xff]
        %v559 = vld [vmem:[#allocation3 + $0x778] sm:$0xff]
        %v560 = vld [vmem:[#allocation3 + $0x780] sm:$0xff]
        %v561 = vld [vmem:[#allocation3 + $0x788] sm:$0xff]
        %v562 = vld [vmem:[#allocation3 + $0x790] sm:$0xff]
        %v563 = vld [vmem:[#allocation3 + $0x798] sm:$0xff]
        %v564 = vld [vmem:[#allocation3 + $0x7a0] sm:$0xff]
        %v565 = vld [vmem:[#allocation3 + $0x7a8] sm:$0xff]
        %v566 = vld [vmem:[#allocation3 + $0x7b0] sm:$0xff]
        %v567 = vld [vmem:[#allocation3 + $0x7b8] sm:$0xff]
        %v568 = vld [vmem:[#allocation3 + $0x7c0] sm:$0xff]
        %v569 = vld [vmem:[#allocation3 + $0x7c8] sm:$0xff]
        %v570 = vld [vmem:[#allocation3 + $0x7d0] sm:$0xff]
        %v571 = vld [vmem:[#allocation3 + $0x7d8] sm:$0xff]
        %v572 = vld [vmem:[#allocation3 + $0x7e0] sm:$0xff]
        %v573 = vld [vmem:[#allocation3 + $0x7e8] sm:$0xff]
        %v574 = vld [vmem:[#allocation3 + $0x7f0] sm:$0xff]
        %v575 = vld [vmem:[#allocation3 + $0x7f8] sm:$0xff]
        %v577 = vcombine.high %v319, %v319
        %579 = vmatprep.subr.mxu0 %v441
        %580 = vmatpush1.msra.mxu0 %v440
        %581 = vmatprep.subr.mxu0 %v433
        %582 = vmatpush1.msra.mxu0 %v432
        %583 = vmatprep.subr.mxu0 %v425
        %584 = vmatpush1.msra.mxu0 %v424
        %585 = vmatprep.subr.mxu0 %v417
        %586 = vmatpush1.msra.mxu0 %v416
        %587 = vmatprep.subr.mxu0 %v409
        %588 = vmatpush1.msra.mxu0 %v408
        %589 = vmatprep.subr.mxu0 %v401
        %590 = vmatpush1.msra.mxu0 %v400
        %591 = vmatprep.subr.mxu0 %v393
        %592 = vmatpush1.msra.mxu0 %v392
        %593 = vmatprep.subr.mxu0 %v385
        %594 = vmatpush1.msra.mxu0 %v384
        %595 = vmatprep.subr.mxu0 %v377
        %596 = vmatpush1.msra.mxu0 %v376
        %597 = vmatprep.subr.mxu0 %v369
        %598 = vmatpush1.msra.mxu0 %v368
        %599 = vmatprep.subr.mxu0 %v361
        %600 = vmatpush1.msra.mxu0 %v360
        %601 = vmatprep.subr.mxu0 %v353
        %602 = vmatpush1.msra.mxu0 %v352
        %603 = vmatprep.subr.mxu0 %v345
        %604 = vmatpush1.msra.mxu0 %v344
        %605 = vmatprep.subr.mxu0 %v337
        %606 = vmatpush1.msra.mxu0 %v336
        %607 = vmatprep.subr.mxu0 %v329
        %608 = vmatpush1.msra.mxu0 %v328
        %609 = vmatprep.subr.mxu0 %v321
        %610 = vmatpush1.msra.mxu0 %v320
        %611 = vmatprep.subr.mxu0 %v569
        %612 = vmatpush2.msra.mxu0 %v568
        %613 = vmatprep.subr.mxu0 %v561
        %614 = vmatpush2.msra.mxu0 %v560
        %615 = vmatprep.subr.mxu0 %v553
        %616 = vmatpush2.msra.mxu0 %v552
        %617 = vmatprep.subr.mxu0 %v545
        %618 = vmatpush2.msra.mxu0 %v544
        %619 = vmatprep.subr.mxu0 %v537
        %620 = vmatpush2.msra.mxu0 %v536
        %621 = vmatprep.subr.mxu0 %v529
        %622 = vmatpush2.msra.mxu0 %v528
        %623 = vmatprep.subr.mxu0 %v521
        %624 = vmatpush2.msra.mxu0 %v520
        %625 = vmatprep.subr.mxu0 %v513
        %626 = vmatpush2.msra.mxu0 %v512
        %627 = vmatprep.subr.mxu0 %v505
        %628 = vmatpush2.msra.mxu0 %v504
        %629 = vmatprep.subr.mxu0 %v497
        %630 = vmatpush2.msra.mxu0 %v496
        %631 = vmatprep.subr.mxu0 %v489
        %632 = vmatpush2.msra.mxu0 %v488
        %633 = vmatprep.subr.mxu0 %v481
        %634 = vmatpush2.msra.mxu0 %v480
        %635 = vmatprep.subr.mxu0 %v473
        %636 = vmatpush2.msra.mxu0 %v472
        %637 = vmatprep.subr.mxu0 %v465
        %638 = vmatpush2.msra.mxu0 %v464
        %639 = vmatprep.subr.mxu0 %v457
        %640 = vmatpush2.msra.mxu0 %v456
        %641 = vmatprep.subr.mxu0 %v449
        %642 = vmatpush2.msra.mxu0 %v448
        %643 = vmatprep.mubr.f32.mxu0 %v577
        %644 = vmatmul.mubr.f32.gmra.mxu0 %v319
        %v645 = vpop.f32.mrf.mxu0
        %v646 = vadd.f32 0.0, %v645
        %v647 = vpop.f32.mrf.mxu0
        %v648 = vadd.f32 0.0, %v647
        %649 = vdwg.mxu0
        %650 = vmatprep.subr.mxu0 %v443
        %651 = vmatpush1.msra.mxu0 %v442
        %652 = vmatprep.subr.mxu0 %v435
        %653 = vmatpush1.msra.mxu0 %v434
        %654 = vmatprep.subr.mxu0 %v427
        %655 = vmatpush1.msra.mxu0 %v426
        %656 = vmatprep.subr.mxu0 %v419
        %657 = vmatpush1.msra.mxu0 %v418
        %658 = vmatprep.subr.mxu0 %v411
        %659 = vmatpush1.msra.mxu0 %v410
        %660 = vmatprep.subr.mxu0 %v403
        %661 = vmatpush1.msra.mxu0 %v402
        %662 = vmatprep.subr.mxu0 %v395
        %663 = vmatpush1.msra.mxu0 %v394
        %664 = vmatprep.subr.mxu0 %v387
        %665 = vmatpush1.msra.mxu0 %v386
        %666 = vmatprep.subr.mxu0 %v379
        %667 = vmatpush1.msra.mxu0 %v378
        %668 = vmatprep.subr.mxu0 %v371
        %669 = vmatpush1.msra.mxu0 %v370
        %670 = vmatprep.subr.mxu0 %v363
        %671 = vmatpush1.msra.mxu0 %v362
        %672 = vmatprep.subr.mxu0 %v355
        %673 = vmatpush1.msra.mxu0 %v354
        %674 = vmatprep.subr.mxu0 %v347
        %675 = vmatpush1.msra.mxu0 %v346
        %676 = vmatprep.subr.mxu0 %v339
        %677 = vmatpush1.msra.mxu0 %v338
        %678 = vmatprep.subr.mxu0 %v331
        %679 = vmatpush1.msra.mxu0 %v330
        %680 = vmatprep.subr.mxu0 %v323
        %681 = vmatpush1.msra.mxu0 %v322
        %682 = vmatprep.subr.mxu0 %v571
        %683 = vmatpush2.msra.mxu0 %v570
        %684 = vmatprep.subr.mxu0 %v563
        %685 = vmatpush2.msra.mxu0 %v562
        %686 = vmatprep.subr.mxu0 %v555
        %687 = vmatpush2.msra.mxu0 %v554
        %688 = vmatprep.subr.mxu0 %v547
        %689 = vmatpush2.msra.mxu0 %v546
        %690 = vmatprep.subr.mxu0 %v539
        %691 = vmatpush2.msra.mxu0 %v538
        %692 = vmatprep.subr.mxu0 %v531
        %693 = vmatpush2.msra.mxu0 %v530
        %694 = vmatprep.subr.mxu0 %v523
        %695 = vmatpush2.msra.mxu0 %v522
        %696 = vmatprep.subr.mxu0 %v515
        %697 = vmatpush2.msra.mxu0 %v514
        %698 = vmatprep.subr.mxu0 %v507
        %699 = vmatpush2.msra.mxu0 %v506
        %700 = vmatprep.subr.mxu0 %v499
        %701 = vmatpush2.msra.mxu0 %v498
        %702 = vmatprep.subr.mxu0 %v491
        %703 = vmatpush2.msra.mxu0 %v490
        %704 = vmatprep.subr.mxu0 %v483
        %705 = vmatpush2.msra.mxu0 %v482
        %706 = vmatprep.subr.mxu0 %v475
        %707 = vmatpush2.msra.mxu0 %v474
        %708 = vmatprep.subr.mxu0 %v467
        %709 = vmatpush2.msra.mxu0 %v466
        %710 = vmatprep.subr.mxu0 %v459
        %711 = vmatpush2.msra.mxu0 %v458
        %712 = vmatprep.subr.mxu0 %v451
        %713 = vmatpush2.msra.mxu0 %v450
        %714 = vmatprep.mubr.f32.mxu0 %v577
        %715 = vmatmul.mubr.f32.gmra.mxu0 %v319
        %v716 = vpop.f32.mrf.mxu0
        %v717 = vadd.f32 0.0, %v716
        %v718 = vpop.f32.mrf.mxu0
        %v719 = vadd.f32 0.0, %v718
        %720 = vdwg.mxu0
        %721 = vmatprep.subr.mxu0 %v445
        %722 = vmatpush1.msra.mxu0 %v444
        %723 = vmatprep.subr.mxu0 %v437
        %724 = vmatpush1.msra.mxu0 %v436
        %725 = vmatprep.subr.mxu0 %v429
        %726 = vmatpush1.msra.mxu0 %v428
        %727 = vmatprep.subr.mxu0 %v421
        %728 = vmatpush1.msra.mxu0 %v420
        %729 = vmatprep.subr.mxu0 %v413
        %730 = vmatpush1.msra.mxu0 %v412
        %731 = vmatprep.subr.mxu0 %v405
        %732 = vmatpush1.msra.mxu0 %v404
        %733 = vmatprep.subr.mxu0 %v397
        %734 = vmatpush1.msra.mxu0 %v396
        %735 = vmatprep.subr.mxu0 %v389
        %736 = vmatpush1.msra.mxu0 %v388
        %737 = vmatprep.subr.mxu0 %v381
        %738 = vmatpush1.msra.mxu0 %v380
        %739 = vmatprep.subr.mxu0 %v373
        %740 = vmatpush1.msra.mxu0 %v372
        %741 = vmatprep.subr.mxu0 %v365
        %742 = vmatpush1.msra.mxu0 %v364
        %743 = vmatprep.subr.mxu0 %v357
        %744 = vmatpush1.msra.mxu0 %v356
        %745 = vmatprep.subr.mxu0 %v349
        %746 = vmatpush1.msra.mxu0 %v348
        %747 = vmatprep.subr.mxu0 %v341
        %748 = vmatpush1.msra.mxu0 %v340
        %749 = vmatprep.subr.mxu0 %v333
        %750 = vmatpush1.msra.mxu0 %v332
        %751 = vmatprep.subr.mxu0 %v325
        %752 = vmatpush1.msra.mxu0 %v324
        %753 = vmatprep.subr.mxu0 %v573
        %754 = vmatpush2.msra.mxu0 %v572
        %755 = vmatprep.subr.mxu0 %v565
        %756 = vmatpush2.msra.mxu0 %v564
        %757 = vmatprep.subr.mxu0 %v557
        %758 = vmatpush2.msra.mxu0 %v556
        %759 = vmatprep.subr.mxu0 %v549
        %760 = vmatpush2.msra.mxu0 %v548
        %761 = vmatprep.subr.mxu0 %v541
        %762 = vmatpush2.msra.mxu0 %v540
        %763 = vmatprep.subr.mxu0 %v533
        %764 = vmatpush2.msra.mxu0 %v532
        %765 = vmatprep.subr.mxu0 %v525
        %766 = vmatpush2.msra.mxu0 %v524
        %767 = vmatprep.subr.mxu0 %v517
        %768 = vmatpush2.msra.mxu0 %v516
        %769 = vmatprep.subr.mxu0 %v509
        %770 = vmatpush2.msra.mxu0 %v508
        %771 = vmatprep.subr.mxu0 %v501
        %772 = vmatpush2.msra.mxu0 %v500
        %773 = vmatprep.subr.mxu0 %v493
        %774 = vmatpush2.msra.mxu0 %v492
        %775 = vmatprep.subr.mxu0 %v485
        %776 = vmatpush2.msra.mxu0 %v484
        %777 = vmatprep.subr.mxu0 %v477
        %778 = vmatpush2.msra.mxu0 %v476
        %779 = vmatprep.subr.mxu0 %v469
        %780 = vmatpush2.msra.mxu0 %v468
        %781 = vmatprep.subr.mxu0 %v461
        %782 = vmatpush2.msra.mxu0 %v460
        %783 = vmatprep.subr.mxu0 %v453
        %784 = vmatpush2.msra.mxu0 %v452
        %785 = vmatprep.mubr.f32.mxu0 %v577
        %786 = vmatmul.mubr.f32.gmra.mxu0 %v319
        %v787 = vpop.f32.mrf.mxu0
        %v788 = vadd.f32 0.0, %v787
        %v789 = vpop.f32.mrf.mxu0
        %v790 = vadd.f32 0.0, %v789
        %791 = vdwg.mxu0
        %792 = vmatprep.subr.mxu0 %v447
        %793 = vmatpush1.msra.mxu0 %v446
        %794 = vmatprep.subr.mxu0 %v439
        %795 = vmatpush1.msra.mxu0 %v438
        %796 = vmatprep.subr.mxu0 %v431
        %797 = vmatpush1.msra.mxu0 %v430
        %798 = vmatprep.subr.mxu0 %v423
        %799 = vmatpush1.msra.mxu0 %v422
        %800 = vmatprep.subr.mxu0 %v415
        %801 = vmatpush1.msra.mxu0 %v414
        %802 = vmatprep.subr.mxu0 %v407
        %803 = vmatpush1.msra.mxu0 %v406
        %804 = vmatprep.subr.mxu0 %v399
        %805 = vmatpush1.msra.mxu0 %v398
        %806 = vmatprep.subr.mxu0 %v391
        %807 = vmatpush1.msra.mxu0 %v390
        %808 = vmatprep.subr.mxu0 %v383
        %809 = vmatpush1.msra.mxu0 %v382
        %810 = vmatprep.subr.mxu0 %v375
        %811 = vmatpush1.msra.mxu0 %v374
        %812 = vmatprep.subr.mxu0 %v367
        %813 = vmatpush1.msra.mxu0 %v366
        %814 = vmatprep.subr.mxu0 %v359
        %815 = vmatpush1.msra.mxu0 %v358
        %816 = vmatprep.subr.mxu0 %v351
        %817 = vmatpush1.msra.mxu0 %v350
        %818 = vmatprep.subr.mxu0 %v343
        %819 = vmatpush1.msra.mxu0 %v342
        %820 = vmatprep.subr.mxu0 %v335
        %821 = vmatpush1.msra.mxu0 %v334
        %822 = vmatprep.subr.mxu0 %v327
        %823 = vmatpush1.msra.mxu0 %v326
        %824 = vmatprep.subr.mxu0 %v575
        %825 = vmatpush2.msra.mxu0 %v574
        %826 = vmatprep.subr.mxu0 %v567
        %827 = vmatpush2.msra.mxu0 %v566
        %828 = vmatprep.subr.mxu0 %v559
        %829 = vmatpush2.msra.mxu0 %v558
        %830 = vmatprep.subr.mxu0 %v551
        %831 = vmatpush2.msra.mxu0 %v550
        %832 = vmatprep.subr.mxu0 %v543
        %833 = vmatpush2.msra.mxu0 %v542
        %834 = vmatprep.subr.mxu0 %v535
        %835 = vmatpush2.msra.mxu0 %v534
        %836 = vmatprep.subr.mxu0 %v527
        %837 = vmatpush2.msra.mxu0 %v526
        %838 = vmatprep.subr.mxu0 %v519
        %839 = vmatpush2.msra.mxu0 %v518
        %840 = vmatprep.subr.mxu0 %v511
        %841 = vmatpush2.msra.mxu0 %v510
        %842 = vmatprep.subr.mxu0 %v503
        %843 = vmatpush2.msra.mxu0 %v502
        %844 = vmatprep.subr.mxu0 %v495
        %845 = vmatpush2.msra.mxu0 %v494
        %846 = vmatprep.subr.mxu0 %v487
        %847 = vmatpush2.msra.mxu0 %v486
        %848 = vmatprep.subr.mxu0 %v479
        %849 = vmatpush2.msra.mxu0 %v478
        %850 = vmatprep.subr.mxu0 %v471
        %851 = vmatpush2.msra.mxu0 %v470
        %852 = vmatprep.subr.mxu0 %v463
        %853 = vmatpush2.msra.mxu0 %v462
        %854 = vmatprep.subr.mxu0 %v455
        %855 = vmatpush2.msra.mxu0 %v454
        %856 = vmatprep.mubr.f32.mxu0 %v577
        %857 = vmatmul.mubr.f32.gmra.mxu0 %v319
        %v858 = vpop.f32.mrf.mxu0
        %v859 = vadd.f32 0.0, %v858
        %v860 = vpop.f32.mrf.mxu0
        %v861 = vadd.f32 0.0, %v860
        %862 = vdwg.mxu0
        %v863 = vld [vmem:[%s2] sm:$0xff]
        %v864 = vld [vmem:[%s2 + $0x8] sm:$0xff]
        %v865 = vld [vmem:[%s2 + $0x10] sm:$0xff]
        %v866 = vld [vmem:[%s2 + $0x18] sm:$0xff]
        %868 = vset.pattern.permute.xlu0 0
        %869 = vperm.xlu0 %868, %v863
        %v870 = vpop.permute.xlu0 %869
        %873 = vset.pattern.permute.xlu0 0
        %874 = vperm.xlu0 %873, %v864
        %v875 = vpop.permute.xlu0 %874
        %878 = vset.pattern.permute.xlu0 0
        %879 = vperm.xlu0 %878, %v865
        %v880 = vpop.permute.xlu0 %879
        %883 = vset.pattern.permute.xlu0 0
        %884 = vperm.xlu0 %883, %v866
        %v885 = vpop.permute.xlu0 %884
        %v887 = vlaneseq
        %v888 = vshrl.u32 %v887, 7
        %v889 = vsub.s32 0, %v888
        %v890 = vrot.slane %v646, %v889
        %v891 = vlaneseq
        %v892 = vshrl.u32 %v891, 7
        %v893 = vsub.s32 0, %v892
        %v894 = vrot.slane %v648, %v893
        %v895 = vlaneseq
        %v896 = vshrl.u32 %v895, 7
        %v897 = vsub.s32 0, %v896
        %v898 = vrot.slane %v717, %v897
        %v899 = vlaneseq
        %v900 = vshrl.u32 %v899, 7
        %v901 = vsub.s32 0, %v900
        %v902 = vrot.slane %v719, %v901
        %v903 = vlaneseq
        %v904 = vshrl.u32 %v903, 7
        %v905 = vsub.s32 0, %v904
        %v906 = vrot.slane %v788, %v905
        %v907 = vlaneseq
        %v908 = vshrl.u32 %v907, 7
        %v909 = vsub.s32 0, %v908
        %v910 = vrot.slane %v790, %v909
        %v911 = vlaneseq
        %v912 = vshrl.u32 %v911, 7
        %v913 = vsub.s32 0, %v912
        %v914 = vrot.slane %v859, %v913
        %v915 = vlaneseq
        %v916 = vshrl.u32 %v915, 7
        %v917 = vsub.s32 0, %v916
        %v918 = vrot.slane %v861, %v917
        %v919 = vmul.f32 %v870, %v890
        %v920 = vmul.f32 %v870, %v894
        %v921 = vmul.f32 %v870, %v898
        %v922 = vmul.f32 %v870, %v902
        %v923 = vmul.f32 %v870, %v906
        %v924 = vmul.f32 %v870, %v910
        %v925 = vmul.f32 %v870, %v914
        %v926 = vmul.f32 %v870, %v918
        %v927 = vmul.f32 %v875, %v890
        %v928 = vmul.f32 %v875, %v894
        %v929 = vmul.f32 %v875, %v898
        %v930 = vmul.f32 %v875, %v902
        %v931 = vmul.f32 %v875, %v906
        %v932 = vmul.f32 %v875, %v910
        %v933 = vmul.f32 %v875, %v914
        %v934 = vmul.f32 %v875, %v918
        %v935 = vmul.f32 %v880, %v890
        %v936 = vmul.f32 %v880, %v894
        %v937 = vmul.f32 %v880, %v898
        %v938 = vmul.f32 %v880, %v902
        %v939 = vmul.f32 %v880, %v906
        %v940 = vmul.f32 %v880, %v910
        %v941 = vmul.f32 %v880, %v914
        %v942 = vmul.f32 %v880, %v918
        %v943 = vmul.f32 %v885, %v890
        %v944 = vmul.f32 %v885, %v894
        %v945 = vmul.f32 %v885, %v898
        %v946 = vmul.f32 %v885, %v902
        %v947 = vmul.f32 %v885, %v906
        %v948 = vmul.f32 %v885, %v910
        %v949 = vmul.f32 %v885, %v914
        %v950 = vmul.f32 %v885, %v918
        %951 = vset.pattern.permute.xlu0 1
        %952 = vperm.xlu0 %951, %v863
        %v953 = vpop.permute.xlu0 %952
        %955 = vset.pattern.permute.xlu0 1
        %956 = vperm.xlu0 %955, %v864
        %v957 = vpop.permute.xlu0 %956
        %959 = vset.pattern.permute.xlu0 1
        %960 = vperm.xlu0 %959, %v865
        %v961 = vpop.permute.xlu0 %960
        %963 = vset.pattern.permute.xlu0 1
        %964 = vperm.xlu0 %963, %v866
        %v965 = vpop.permute.xlu0 %964
        %v967 = vlaneseq
        %v968 = vshrl.u32 %v967, 7
        %v969 = vsub.s32 1, %v968
        %v970 = vrot.slane %v646, %v969
        %v971 = vlaneseq
        %v972 = vshrl.u32 %v971, 7
        %v973 = vsub.s32 1, %v972
        %v974 = vrot.slane %v648, %v973
        %v975 = vlaneseq
        %v976 = vshrl.u32 %v975, 7
        %v977 = vsub.s32 1, %v976
        %v978 = vrot.slane %v717, %v977
        %v979 = vlaneseq
        %v980 = vshrl.u32 %v979, 7
        %v981 = vsub.s32 1, %v980
        %v982 = vrot.slane %v719, %v981
        %v983 = vlaneseq
        %v984 = vshrl.u32 %v983, 7
        %v985 = vsub.s32 1, %v984
        %v986 = vrot.slane %v788, %v985
        %v987 = vlaneseq
        %v988 = vshrl.u32 %v987, 7
        %v989 = vsub.s32 1, %v988
        %v990 = vrot.slane %v790, %v989
        %v991 = vlaneseq
        %v992 = vshrl.u32 %v991, 7
        %v993 = vsub.s32 1, %v992
        %v994 = vrot.slane %v859, %v993
        %v995 = vlaneseq
        %v996 = vshrl.u32 %v995, 7
        %v997 = vsub.s32 1, %v996
        %v998 = vrot.slane %v861, %v997
        %v999 = vmul.f32 %v953, %v970
        %v1000 = vmul.f32 %v953, %v974
        %v1001 = vmul.f32 %v953, %v978
        %v1002 = vmul.f32 %v953, %v982
        %v1003 = vmul.f32 %v953, %v986
        %v1004 = vmul.f32 %v953, %v990
        %v1005 = vmul.f32 %v953, %v994
        %v1006 = vmul.f32 %v953, %v998
        %v1007 = vmul.f32 %v957, %v970
        %v1008 = vmul.f32 %v957, %v974
        %v1009 = vmul.f32 %v957, %v978
        %v1010 = vmul.f32 %v957, %v982
        %v1011 = vmul.f32 %v957, %v986
        %v1012 = vmul.f32 %v957, %v990
        %v1013 = vmul.f32 %v957, %v994
        %v1014 = vmul.f32 %v957, %v998
        %v1015 = vmul.f32 %v961, %v970
        %v1016 = vmul.f32 %v961, %v974
        %v1017 = vmul.f32 %v961, %v978
        %v1018 = vmul.f32 %v961, %v982
        %v1019 = vmul.f32 %v961, %v986
        %v1020 = vmul.f32 %v961, %v990
        %v1021 = vmul.f32 %v961, %v994
        %v1022 = vmul.f32 %v961, %v998
        %v1023 = vmul.f32 %v965, %v970
        %v1024 = vmul.f32 %v965, %v974
        %v1025 = vmul.f32 %v965, %v978
        %v1026 = vmul.f32 %v965, %v982
        %v1027 = vmul.f32 %v965, %v986
        %v1028 = vmul.f32 %v965, %v990
        %v1029 = vmul.f32 %v965, %v994
        %v1030 = vmul.f32 %v965, %v998
        %v1031 = vadd.f32 %v919, %v999
        %v1032 = vadd.f32 %v920, %v1000
        %v1033 = vadd.f32 %v921, %v1001
        %v1034 = vadd.f32 %v922, %v1002
        %v1035 = vadd.f32 %v923, %v1003
        %v1036 = vadd.f32 %v924, %v1004
        %v1037 = vadd.f32 %v925, %v1005
        %v1038 = vadd.f32 %v926, %v1006
        %v1039 = vadd.f32 %v927, %v1007
        %v1040 = vadd.f32 %v928, %v1008
        %v1041 = vadd.f32 %v929, %v1009
        %v1042 = vadd.f32 %v930, %v1010
        %v1043 = vadd.f32 %v931, %v1011
        %v1044 = vadd.f32 %v932, %v1012
        %v1045 = vadd.f32 %v933, %v1013
        %v1046 = vadd.f32 %v934, %v1014
        %v1047 = vadd.f32 %v935, %v1015
        %v1048 = vadd.f32 %v936, %v1016
        %v1049 = vadd.f32 %v937, %v1017
        %v1050 = vadd.f32 %v938, %v1018
        %v1051 = vadd.f32 %v939, %v1019
        %v1052 = vadd.f32 %v940, %v1020
        %v1053 = vadd.f32 %v941, %v1021
        %v1054 = vadd.f32 %v942, %v1022
        %v1055 = vadd.f32 %v943, %v1023
        %v1056 = vadd.f32 %v944, %v1024
        %v1057 = vadd.f32 %v945, %v1025
        %v1058 = vadd.f32 %v946, %v1026
        %v1059 = vadd.f32 %v947, %v1027
        %v1060 = vadd.f32 %v948, %v1028
        %v1061 = vadd.f32 %v949, %v1029
        %v1062 = vadd.f32 %v950, %v1030
        %1063 = vset.pattern.permute.xlu0 2
        %1064 = vperm.xlu0 %1063, %v863
        %v1065 = vpop.permute.xlu0 %1064
        %1067 = vset.pattern.permute.xlu0 2
        %1068 = vperm.xlu0 %1067, %v864
        %v1069 = vpop.permute.xlu0 %1068
        %1071 = vset.pattern.permute.xlu0 2
        %1072 = vperm.xlu0 %1071, %v865
        %v1073 = vpop.permute.xlu0 %1072
        %1075 = vset.pattern.permute.xlu0 2
        %1076 = vperm.xlu0 %1075, %v866
        %v1077 = vpop.permute.xlu0 %1076
        %v1079 = vlaneseq
        %v1080 = vshrl.u32 %v1079, 7
        %v1081 = vsub.s32 2, %v1080
        %v1082 = vrot.slane %v646, %v1081
        %v1083 = vlaneseq
        %v1084 = vshrl.u32 %v1083, 7
        %v1085 = vsub.s32 2, %v1084
        %v1086 = vrot.slane %v648, %v1085
        %v1087 = vlaneseq
        %v1088 = vshrl.u32 %v1087, 7
        %v1089 = vsub.s32 2, %v1088
        %v1090 = vrot.slane %v717, %v1089
        %v1091 = vlaneseq
        %v1092 = vshrl.u32 %v1091, 7
        %v1093 = vsub.s32 2, %v1092
        %v1094 = vrot.slane %v719, %v1093
        %v1095 = vlaneseq
        %v1096 = vshrl.u32 %v1095, 7
        %v1097 = vsub.s32 2, %v1096
        %v1098 = vrot.slane %v788, %v1097
        %v1099 = vlaneseq
        %v1100 = vshrl.u32 %v1099, 7
        %v1101 = vsub.s32 2, %v1100
        %v1102 = vrot.slane %v790, %v1101
        %v1103 = vlaneseq
        %v1104 = vshrl.u32 %v1103, 7
        %v1105 = vsub.s32 2, %v1104
        %v1106 = vrot.slane %v859, %v1105
        %v1107 = vlaneseq
        %v1108 = vshrl.u32 %v1107, 7
        %v1109 = vsub.s32 2, %v1108
        %v1110 = vrot.slane %v861, %v1109
        %v1111 = vmul.f32 %v1065, %v1082
        %v1112 = vmul.f32 %v1065, %v1086
        %v1113 = vmul.f32 %v1065, %v1090
        %v1114 = vmul.f32 %v1065, %v1094
        %v1115 = vmul.f32 %v1065, %v1098
        %v1116 = vmul.f32 %v1065, %v1102
        %v1117 = vmul.f32 %v1065, %v1106
        %v1118 = vmul.f32 %v1065, %v1110
        %v1119 = vmul.f32 %v1069, %v1082
        %v1120 = vmul.f32 %v1069, %v1086
        %v1121 = vmul.f32 %v1069, %v1090
        %v1122 = vmul.f32 %v1069, %v1094
        %v1123 = vmul.f32 %v1069, %v1098
        %v1124 = vmul.f32 %v1069, %v1102
        %v1125 = vmul.f32 %v1069, %v1106
        %v1126 = vmul.f32 %v1069, %v1110
        %v1127 = vmul.f32 %v1073, %v1082
        %v1128 = vmul.f32 %v1073, %v1086
        %v1129 = vmul.f32 %v1073, %v1090
        %v1130 = vmul.f32 %v1073, %v1094
        %v1131 = vmul.f32 %v1073, %v1098
        %v1132 = vmul.f32 %v1073, %v1102
        %v1133 = vmul.f32 %v1073, %v1106
        %v1134 = vmul.f32 %v1073, %v1110
        %v1135 = vmul.f32 %v1077, %v1082
        %v1136 = vmul.f32 %v1077, %v1086
        %v1137 = vmul.f32 %v1077, %v1090
        %v1138 = vmul.f32 %v1077, %v1094
        %v1139 = vmul.f32 %v1077, %v1098
        %v1140 = vmul.f32 %v1077, %v1102
        %v1141 = vmul.f32 %v1077, %v1106
        %v1142 = vmul.f32 %v1077, %v1110
        %v1143 = vadd.f32 %v1031, %v1111
        %v1144 = vadd.f32 %v1032, %v1112
        %v1145 = vadd.f32 %v1033, %v1113
        %v1146 = vadd.f32 %v1034, %v1114
        %v1147 = vadd.f32 %v1035, %v1115
        %v1148 = vadd.f32 %v1036, %v1116
        %v1149 = vadd.f32 %v1037, %v1117
        %v1150 = vadd.f32 %v1038, %v1118
        %v1151 = vadd.f32 %v1039, %v1119
        %v1152 = vadd.f32 %v1040, %v1120
        %v1153 = vadd.f32 %v1041, %v1121
        %v1154 = vadd.f32 %v1042, %v1122
        %v1155 = vadd.f32 %v1043, %v1123
        %v1156 = vadd.f32 %v1044, %v1124
        %v1157 = vadd.f32 %v1045, %v1125
        %v1158 = vadd.f32 %v1046, %v1126
        %v1159 = vadd.f32 %v1047, %v1127
        %v1160 = vadd.f32 %v1048, %v1128
        %v1161 = vadd.f32 %v1049, %v1129
        %v1162 = vadd.f32 %v1050, %v1130
        %v1163 = vadd.f32 %v1051, %v1131
        %v1164 = vadd.f32 %v1052, %v1132
        %v1165 = vadd.f32 %v1053, %v1133
        %v1166 = vadd.f32 %v1054, %v1134
        %v1167 = vadd.f32 %v1055, %v1135
        %v1168 = vadd.f32 %v1056, %v1136
        %v1169 = vadd.f32 %v1057, %v1137
        %v1170 = vadd.f32 %v1058, %v1138
        %v1171 = vadd.f32 %v1059, %v1139
        %v1172 = vadd.f32 %v1060, %v1140
        %v1173 = vadd.f32 %v1061, %v1141
        %v1174 = vadd.f32 %v1062, %v1142
        %1175 = vset.pattern.permute.xlu0 3
        %1176 = vperm.xlu0 %1175, %v863
        %v1177 = vpop.permute.xlu0 %1176
        %1179 = vset.pattern.permute.xlu0 3
        %1180 = vperm.xlu0 %1179, %v864
        %v1181 = vpop.permute.xlu0 %1180
        %1183 = vset.pattern.permute.xlu0 3
        %1184 = vperm.xlu0 %1183, %v865
        %v1185 = vpop.permute.xlu0 %1184
        %1187 = vset.pattern.permute.xlu0 3
        %1188 = vperm.xlu0 %1187, %v866
        %v1189 = vpop.permute.xlu0 %1188
        %v1191 = vlaneseq
        %v1192 = vshrl.u32 %v1191, 7
        %v1193 = vsub.s32 3, %v1192
        %v1194 = vrot.slane %v646, %v1193
        %v1195 = vlaneseq
        %v1196 = vshrl.u32 %v1195, 7
        %v1197 = vsub.s32 3, %v1196
        %v1198 = vrot.slane %v648, %v1197
        %v1199 = vlaneseq
        %v1200 = vshrl.u32 %v1199, 7
        %v1201 = vsub.s32 3, %v1200
        %v1202 = vrot.slane %v717, %v1201
        %v1203 = vlaneseq
        %v1204 = vshrl.u32 %v1203, 7
        %v1205 = vsub.s32 3, %v1204
        %v1206 = vrot.slane %v719, %v1205
        %v1207 = vlaneseq
        %v1208 = vshrl.u32 %v1207, 7
        %v1209 = vsub.s32 3, %v1208
        %v1210 = vrot.slane %v788, %v1209
        %v1211 = vlaneseq
        %v1212 = vshrl.u32 %v1211, 7
        %v1213 = vsub.s32 3, %v1212
        %v1214 = vrot.slane %v790, %v1213
        %v1215 = vlaneseq
        %v1216 = vshrl.u32 %v1215, 7
        %v1217 = vsub.s32 3, %v1216
        %v1218 = vrot.slane %v859, %v1217
        %v1219 = vlaneseq
        %v1220 = vshrl.u32 %v1219, 7
        %v1221 = vsub.s32 3, %v1220
        %v1222 = vrot.slane %v861, %v1221
        %v1223 = vmul.f32 %v1177, %v1194
        %v1224 = vmul.f32 %v1177, %v1198
        %v1225 = vmul.f32 %v1177, %v1202
        %v1226 = vmul.f32 %v1177, %v1206
        %v1227 = vmul.f32 %v1177, %v1210
        %v1228 = vmul.f32 %v1177, %v1214
        %v1229 = vmul.f32 %v1177, %v1218
        %v1230 = vmul.f32 %v1177, %v1222
        %v1231 = vmul.f32 %v1181, %v1194
        %v1232 = vmul.f32 %v1181, %v1198
        %v1233 = vmul.f32 %v1181, %v1202
        %v1234 = vmul.f32 %v1181, %v1206
        %v1235 = vmul.f32 %v1181, %v1210
        %v1236 = vmul.f32 %v1181, %v1214
        %v1237 = vmul.f32 %v1181, %v1218
        %v1238 = vmul.f32 %v1181, %v1222
        %v1239 = vmul.f32 %v1185, %v1194
        %v1240 = vmul.f32 %v1185, %v1198
        %v1241 = vmul.f32 %v1185, %v1202
        %v1242 = vmul.f32 %v1185, %v1206
        %v1243 = vmul.f32 %v1185, %v1210
        %v1244 = vmul.f32 %v1185, %v1214
        %v1245 = vmul.f32 %v1185, %v1218
        %v1246 = vmul.f32 %v1185, %v1222
        %v1247 = vmul.f32 %v1189, %v1194
        %v1248 = vmul.f32 %v1189, %v1198
        %v1249 = vmul.f32 %v1189, %v1202
        %v1250 = vmul.f32 %v1189, %v1206
        %v1251 = vmul.f32 %v1189, %v1210
        %v1252 = vmul.f32 %v1189, %v1214
        %v1253 = vmul.f32 %v1189, %v1218
        %v1254 = vmul.f32 %v1189, %v1222
        %v1255 = vadd.f32 %v1143, %v1223
        %v1256 = vadd.f32 %v1144, %v1224
        %v1257 = vadd.f32 %v1145, %v1225
        %v1258 = vadd.f32 %v1146, %v1226
        %v1259 = vadd.f32 %v1147, %v1227
        %v1260 = vadd.f32 %v1148, %v1228
        %v1261 = vadd.f32 %v1149, %v1229
        %v1262 = vadd.f32 %v1150, %v1230
        %v1263 = vadd.f32 %v1151, %v1231
        %v1264 = vadd.f32 %v1152, %v1232
        %v1265 = vadd.f32 %v1153, %v1233
        %v1266 = vadd.f32 %v1154, %v1234
        %v1267 = vadd.f32 %v1155, %v1235
        %v1268 = vadd.f32 %v1156, %v1236
        %v1269 = vadd.f32 %v1157, %v1237
        %v1270 = vadd.f32 %v1158, %v1238
        %v1271 = vadd.f32 %v1159, %v1239
        %v1272 = vadd.f32 %v1160, %v1240
        %v1273 = vadd.f32 %v1161, %v1241
        %v1274 = vadd.f32 %v1162, %v1242
        %v1275 = vadd.f32 %v1163, %v1243
        %v1276 = vadd.f32 %v1164, %v1244
        %v1277 = vadd.f32 %v1165, %v1245
        %v1278 = vadd.f32 %v1166, %v1246
        %v1279 = vadd.f32 %v1167, %v1247
        %v1280 = vadd.f32 %v1168, %v1248
        %v1281 = vadd.f32 %v1169, %v1249
        %v1282 = vadd.f32 %v1170, %v1250
        %v1283 = vadd.f32 %v1171, %v1251
        %v1284 = vadd.f32 %v1172, %v1252
        %v1285 = vadd.f32 %v1173, %v1253
        %v1286 = vadd.f32 %v1174, %v1254
        %v1287 = vld [vmem:[%s3] sm:$0xff]
        %v1288 = vld [vmem:[%s3 + $0x8] sm:$0xff]
        %v1289 = vld [vmem:[%s3 + $0x10] sm:$0xff]
        %v1290 = vld [vmem:[%s3 + $0x18] sm:$0xff]
        %1292 = vset.pattern.permute.xlu0 0
        %1293 = vperm.xlu0 %1292, %v1287
        %v1294 = vpop.permute.xlu0 %1293
        %1297 = vset.pattern.permute.xlu0 0
        %1298 = vperm.xlu0 %1297, %v1288
        %v1299 = vpop.permute.xlu0 %1298
        %1302 = vset.pattern.permute.xlu0 0
        %1303 = vperm.xlu0 %1302, %v1289
        %v1304 = vpop.permute.xlu0 %1303
        %1307 = vset.pattern.permute.xlu0 0
        %1308 = vperm.xlu0 %1307, %v1290
        %v1309 = vpop.permute.xlu0 %1308
        %v1311 = vadd.f32 %v1255, %v1294
        %v1312 = vadd.f32 %v1256, %v1294
        %v1313 = vadd.f32 %v1257, %v1294
        %v1314 = vadd.f32 %v1258, %v1294
        %v1315 = vadd.f32 %v1259, %v1294
        %v1316 = vadd.f32 %v1260, %v1294
        %v1317 = vadd.f32 %v1261, %v1294
        %v1318 = vadd.f32 %v1262, %v1294
        %v1319 = vadd.f32 %v1263, %v1299
        %v1320 = vadd.f32 %v1264, %v1299
        %v1321 = vadd.f32 %v1265, %v1299
        %v1322 = vadd.f32 %v1266, %v1299
        %v1323 = vadd.f32 %v1267, %v1299
        %v1324 = vadd.f32 %v1268, %v1299
        %v1325 = vadd.f32 %v1269, %v1299
        %v1326 = vadd.f32 %v1270, %v1299
        %v1327 = vadd.f32 %v1271, %v1304
        %v1328 = vadd.f32 %v1272, %v1304
        %v1329 = vadd.f32 %v1273, %v1304
        %v1330 = vadd.f32 %v1274, %v1304
        %v1331 = vadd.f32 %v1275, %v1304
        %v1332 = vadd.f32 %v1276, %v1304
        %v1333 = vadd.f32 %v1277, %v1304
        %v1334 = vadd.f32 %v1278, %v1304
        %v1335 = vadd.f32 %v1279, %v1309
        %v1336 = vadd.f32 %v1280, %v1309
        %v1337 = vadd.f32 %v1281, %v1309
        %v1338 = vadd.f32 %v1282, %v1309
        %v1339 = vadd.f32 %v1283, %v1309
        %v1340 = vadd.f32 %v1284, %v1309
        %v1341 = vadd.f32 %v1285, %v1309
        %v1342 = vadd.f32 %v1286, %v1309
        %vm1343 = vcmp.gt.f32.partialorder %v1311, 0.0
        %vm1344 = vcmp.gt.f32.partialorder %v1312, 0.0
        %vm1345 = vcmp.gt.f32.partialorder %v1313, 0.0
        %vm1346 = vcmp.gt.f32.partialorder %v1314, 0.0
        %vm1347 = vcmp.gt.f32.partialorder %v1315, 0.0
        %vm1348 = vcmp.gt.f32.partialorder %v1316, 0.0
        %vm1349 = vcmp.gt.f32.partialorder %v1317, 0.0
        %vm1350 = vcmp.gt.f32.partialorder %v1318, 0.0
        %vm1351 = vcmp.gt.f32.partialorder %v1319, 0.0
        %vm1352 = vcmp.gt.f32.partialorder %v1320, 0.0
        %vm1353 = vcmp.gt.f32.partialorder %v1321, 0.0
        %vm1354 = vcmp.gt.f32.partialorder %v1322, 0.0
        %vm1355 = vcmp.gt.f32.partialorder %v1323, 0.0
        %vm1356 = vcmp.gt.f32.partialorder %v1324, 0.0
        %vm1357 = vcmp.gt.f32.partialorder %v1325, 0.0
        %vm1358 = vcmp.gt.f32.partialorder %v1326, 0.0
        %vm1359 = vcmp.gt.f32.partialorder %v1327, 0.0
        %vm1360 = vcmp.gt.f32.partialorder %v1328, 0.0
        %vm1361 = vcmp.gt.f32.partialorder %v1329, 0.0
        %vm1362 = vcmp.gt.f32.partialorder %v1330, 0.0
        %vm1363 = vcmp.gt.f32.partialorder %v1331, 0.0
        %vm1364 = vcmp.gt.f32.partialorder %v1332, 0.0
        %vm1365 = vcmp.gt.f32.partialorder %v1333, 0.0
        %vm1366 = vcmp.gt.f32.partialorder %v1334, 0.0
        %vm1367 = vcmp.gt.f32.partialorder %v1335, 0.0
        %vm1368 = vcmp.gt.f32.partialorder %v1336, 0.0
        %vm1369 = vcmp.gt.f32.partialorder %v1337, 0.0
        %vm1370 = vcmp.gt.f32.partialorder %v1338, 0.0
        %vm1371 = vcmp.gt.f32.partialorder %v1339, 0.0
        %vm1372 = vcmp.gt.f32.partialorder %v1340, 0.0
        %vm1373 = vcmp.gt.f32.partialorder %v1341, 0.0
        %vm1374 = vcmp.gt.f32.partialorder %v1342, 0.0
        %v1375 = vmul.f32 %v1311, 0.2
        %v1376 = vmul.f32 %v1312, 0.2
        %v1377 = vmul.f32 %v1313, 0.2
        %v1378 = vmul.f32 %v1314, 0.2
        %v1379 = vmul.f32 %v1315, 0.2
        %v1380 = vmul.f32 %v1316, 0.2
        %v1381 = vmul.f32 %v1317, 0.2
        %v1382 = vmul.f32 %v1318, 0.2
        %v1383 = vmul.f32 %v1319, 0.2
        %v1384 = vmul.f32 %v1320, 0.2
        %v1385 = vmul.f32 %v1321, 0.2
        %v1386 = vmul.f32 %v1322, 0.2
        %v1387 = vmul.f32 %v1323, 0.2
        %v1388 = vmul.f32 %v1324, 0.2
        %v1389 = vmul.f32 %v1325, 0.2
        %v1390 = vmul.f32 %v1326, 0.2
        %v1391 = vmul.f32 %v1327, 0.2
        %v1392 = vmul.f32 %v1328, 0.2
        %v1393 = vmul.f32 %v1329, 0.2
        %v1394 = vmul.f32 %v1330, 0.2
        %v1395 = vmul.f32 %v1331, 0.2
        %v1396 = vmul.f32 %v1332, 0.2
        %v1397 = vmul.f32 %v1333, 0.2
        %v1398 = vmul.f32 %v1334, 0.2
        %v1399 = vmul.f32 %v1335, 0.2
        %v1400 = vmul.f32 %v1336, 0.2
        %v1401 = vmul.f32 %v1337, 0.2
        %v1402 = vmul.f32 %v1338, 0.2
        %v1403 = vmul.f32 %v1339, 0.2
        %v1404 = vmul.f32 %v1340, 0.2
        %v1405 = vmul.f32 %v1341, 0.2
        %v1406 = vmul.f32 %v1342, 0.2
        %v1407 = vsel %vm1343, %v1311, %v1375
        %v1408 = vsel %vm1344, %v1312, %v1376
        %v1409 = vsel %vm1345, %v1313, %v1377
        %v1410 = vsel %vm1346, %v1314, %v1378
        %v1411 = vsel %vm1347, %v1315, %v1379
        %v1412 = vsel %vm1348, %v1316, %v1380
        %v1413 = vsel %vm1349, %v1317, %v1381
        %v1414 = vsel %vm1350, %v1318, %v1382
        %v1415 = vsel %vm1351, %v1319, %v1383
        %v1416 = vsel %vm1352, %v1320, %v1384
        %v1417 = vsel %vm1353, %v1321, %v1385
        %v1418 = vsel %vm1354, %v1322, %v1386
        %v1419 = vsel %vm1355, %v1323, %v1387
        %v1420 = vsel %vm1356, %v1324, %v1388
        %v1421 = vsel %vm1357, %v1325, %v1389
        %v1422 = vsel %vm1358, %v1326, %v1390
        %v1423 = vsel %vm1359, %v1327, %v1391
        %v1424 = vsel %vm1360, %v1328, %v1392
        %v1425 = vsel %vm1361, %v1329, %v1393
        %v1426 = vsel %vm1362, %v1330, %v1394
        %v1427 = vsel %vm1363, %v1331, %v1395
        %v1428 = vsel %vm1364, %v1332, %v1396
        %v1429 = vsel %vm1365, %v1333, %v1397
        %v1430 = vsel %vm1366, %v1334, %v1398
        %v1431 = vsel %vm1367, %v1335, %v1399
        %v1432 = vsel %vm1368, %v1336, %v1400
        %v1433 = vsel %vm1369, %v1337, %v1401
        %v1434 = vsel %vm1370, %v1338, %v1402
        %v1435 = vsel %vm1371, %v1339, %v1403
        %v1436 = vsel %vm1372, %v1340, %v1404
        %v1437 = vsel %vm1373, %v1341, %v1405
        %v1438 = vsel %vm1374, %v1342, %v1406
        %v1439 = vld [vmem:[%s4] sm:$0xff]
        %v1440 = vld [vmem:[%s4 + $0x8] sm:$0xff]
        %v1441 = vld [vmem:[%s4 + $0x10] sm:$0xff]
        %v1442 = vld [vmem:[%s4 + $0x18] sm:$0xff]
        %v1443 = vld [vmem:[%s5] sm:$0xff]
        %v1444 = vld [vmem:[%s5 + $0x8] sm:$0xff]
        %v1445 = vld [vmem:[%s5 + $0x10] sm:$0xff]
        %v1446 = vld [vmem:[%s5 + $0x18] sm:$0xff]
        %1448 = vset.pattern.permute.xlu0 0
        %1449 = vperm.xlu0 %1448, %v1443
        %v1450 = vpop.permute.xlu0 %1449
        %1453 = vset.pattern.permute.xlu0 0
        %1454 = vperm.xlu0 %1453, %v1444
        %v1455 = vpop.permute.xlu0 %1454
        %1458 = vset.pattern.permute.xlu0 0
        %1459 = vperm.xlu0 %1458, %v1445
        %v1460 = vpop.permute.xlu0 %1459
        %1463 = vset.pattern.permute.xlu0 0
        %1464 = vperm.xlu0 %1463, %v1446
        %v1465 = vpop.permute.xlu0 %1464
        %vm1467 = vcmask 261120
        %v1469 = vsel %vm1467, %v1439, 0
        %v1472 = vsel %vm1467, %v1440, 0
        %v1475 = vsel %vm1467, %v1441, 0
        %v1478 = vsel %vm1467, %v1442, 0
        %1480 = vmatprep.subr.mxu0 0.0
        %1481 = vmatpush1.msra.mxu0 0.0
        %1482 = vmatprep.subr.mxu0 0.0
        %1483 = vmatpush1.msra.mxu0 0.0
        %1484 = vmatprep.subr.mxu0 0.0
        %1485 = vmatpush1.msra.mxu0 0.0
        %1486 = vmatprep.subr.mxu0 0.0
        %1487 = vmatpush1.msra.mxu0 0.0
        %1488 = vmatprep.subr.mxu0 0.0
        %1489 = vmatpush1.msra.mxu0 0.0
        %1490 = vmatprep.subr.mxu0 0.0
        %1491 = vmatpush1.msra.mxu0 0.0
        %1492 = vmatprep.subr.mxu0 0.0
        %1493 = vmatpush1.msra.mxu0 0.0
        %1494 = vmatprep.subr.mxu0 0.0
        %1495 = vmatpush1.msra.mxu0 0.0
        %1496 = vmatprep.subr.mxu0 0.0
        %1497 = vmatpush1.msra.mxu0 0.0
        %1498 = vmatprep.subr.mxu0 0.0
        %1499 = vmatpush1.msra.mxu0 0.0
        %1500 = vmatprep.subr.mxu0 0.0
        %1501 = vmatpush1.msra.mxu0 0.0
        %1502 = vmatprep.subr.mxu0 0.0
        %1503 = vmatpush1.msra.mxu0 0.0
        %1504 = vmatprep.subr.mxu0 %v1432
        %1505 = vmatpush1.msra.mxu0 %v1431
        %1506 = vmatprep.subr.mxu0 %v1424
        %1507 = vmatpush1.msra.mxu0 %v1423
        %1508 = vmatprep.subr.mxu0 %v1416
        %1509 = vmatpush1.msra.mxu0 %v1415
        %1510 = vmatprep.subr.mxu0 %v1408
        %1511 = vmatpush1.msra.mxu0 %v1407
        %1512 = vmatprep.subr.mxu0 0.0
        %1513 = vmatpush2.msra.mxu0 0.0
        %1514 = vmatprep.subr.mxu0 0.0
        %1515 = vmatpush2.msra.mxu0 0.0
        %1516 = vmatprep.subr.mxu0 0.0
        %1517 = vmatpush2.msra.mxu0 0.0
        %1518 = vmatprep.subr.mxu0 0.0
        %1519 = vmatpush2.msra.mxu0 0.0
        %1520 = vmatprep.subr.mxu0 0.0
        %1521 = vmatpush2.msra.mxu0 0.0
        %1522 = vmatprep.subr.mxu0 0.0
        %1523 = vmatpush2.msra.mxu0 0.0
        %1524 = vmatprep.subr.mxu0 0.0
        %1525 = vmatpush2.msra.mxu0 0.0
        %1526 = vmatprep.subr.mxu0 0.0
        %1527 = vmatpush2.msra.mxu0 0.0
        %1528 = vmatprep.subr.mxu0 0.0
        %1529 = vmatpush2.msra.mxu0 0.0
        %1530 = vmatprep.subr.mxu0 0.0
        %1531 = vmatpush2.msra.mxu0 0.0
        %1532 = vmatprep.subr.mxu0 0.0
        %1533 = vmatpush2.msra.mxu0 0.0
        %1534 = vmatprep.subr.mxu0 0.0
        %1535 = vmatpush2.msra.mxu0 0.0
        %1536 = vmatprep.subr.mxu0 0.0
        %1537 = vmatpush2.msra.mxu0 0.0
        %1538 = vmatprep.subr.mxu0 0.0
        %1539 = vmatpush2.msra.mxu0 0.0
        %1540 = vmatprep.subr.mxu0 0.0
        %1541 = vmatpush2.msra.mxu0 0.0
        %1542 = vmatprep.subr.mxu0 0.0
        %1543 = vmatpush2.msra.mxu0 0.0
        %1544 = vmatprep.mubr.f32.mxu0 0.0
        %1545 = vmatmul.mubr.f32.gmra.mxu0 %v1469
        %v1546 = vpop.f32.mrf.mxu0
        %v1547 = vadd.f32 %v1450, %v1546
        %v1548 = vpop.f32.mrf.mxu0
        %v1549 = vadd.f32 %v1450, %v1548
        %1550 = vmatprep.mubr.f32.mxu0 0.0
        %1551 = vmatmul.mubr.f32.gmra.mxu0 %v1472
        %v1552 = vpop.f32.mrf.mxu0
        %v1553 = vadd.f32 %v1455, %v1552
        %v1554 = vpop.f32.mrf.mxu0
        %v1555 = vadd.f32 %v1455, %v1554
        %1556 = vmatprep.mubr.f32.mxu0 0.0
        %1557 = vmatmul.mubr.f32.gmra.mxu0 %v1475
        %v1558 = vpop.f32.mrf.mxu0
        %v1559 = vadd.f32 %v1460, %v1558
        %v1560 = vpop.f32.mrf.mxu0
        %v1561 = vadd.f32 %v1460, %v1560
        %1562 = vmatprep.mubr.f32.mxu0 0.0
        %1563 = vmatmul.mubr.f32.gmra.mxu0 %v1478
        %v1564 = vpop.f32.mrf.mxu0
        %v1565 = vadd.f32 %v1465, %v1564
        %v1566 = vpop.f32.mrf.mxu0
        %v1567 = vadd.f32 %v1465, %v1566
        %1568 = vdwg.mxu0
        %1569 = vmatprep.subr.mxu0 0.0
        %1570 = vmatpush1.msra.mxu0 0.0
        %1571 = vmatprep.subr.mxu0 0.0
        %1572 = vmatpush1.msra.mxu0 0.0
        %1573 = vmatprep.subr.mxu0 0.0
        %1574 = vmatpush1.msra.mxu0 0.0
        %1575 = vmatprep.subr.mxu0 0.0
        %1576 = vmatpush1.msra.mxu0 0.0
        %1577 = vmatprep.subr.mxu0 0.0
        %1578 = vmatpush1.msra.mxu0 0.0
        %1579 = vmatprep.subr.mxu0 0.0
        %1580 = vmatpush1.msra.mxu0 0.0
        %1581 = vmatprep.subr.mxu0 0.0
        %1582 = vmatpush1.msra.mxu0 0.0
        %1583 = vmatprep.subr.mxu0 0.0
        %1584 = vmatpush1.msra.mxu0 0.0
        %1585 = vmatprep.subr.mxu0 0.0
        %1586 = vmatpush1.msra.mxu0 0.0
        %1587 = vmatprep.subr.mxu0 0.0
        %1588 = vmatpush1.msra.mxu0 0.0
        %1589 = vmatprep.subr.mxu0 0.0
        %1590 = vmatpush1.msra.mxu0 0.0
        %1591 = vmatprep.subr.mxu0 0.0
        %1592 = vmatpush1.msra.mxu0 0.0
        %1593 = vmatprep.subr.mxu0 %v1434
        %1594 = vmatpush1.msra.mxu0 %v1433
        %1595 = vmatprep.subr.mxu0 %v1426
        %1596 = vmatpush1.msra.mxu0 %v1425
        %1597 = vmatprep.subr.mxu0 %v1418
        %1598 = vmatpush1.msra.mxu0 %v1417
        %1599 = vmatprep.subr.mxu0 %v1410
        %1600 = vmatpush1.msra.mxu0 %v1409
        %1601 = vmatprep.subr.mxu0 0.0
        %1602 = vmatpush2.msra.mxu0 0.0
        %1603 = vmatprep.subr.mxu0 0.0
        %1604 = vmatpush2.msra.mxu0 0.0
        %1605 = vmatprep.subr.mxu0 0.0
        %1606 = vmatpush2.msra.mxu0 0.0
        %1607 = vmatprep.subr.mxu0 0.0
        %1608 = vmatpush2.msra.mxu0 0.0
        %1609 = vmatprep.subr.mxu0 0.0
        %1610 = vmatpush2.msra.mxu0 0.0
        %1611 = vmatprep.subr.mxu0 0.0
        %1612 = vmatpush2.msra.mxu0 0.0
        %1613 = vmatprep.subr.mxu0 0.0
        %1614 = vmatpush2.msra.mxu0 0.0
        %1615 = vmatprep.subr.mxu0 0.0
        %1616 = vmatpush2.msra.mxu0 0.0
        %1617 = vmatprep.subr.mxu0 0.0
        %1618 = vmatpush2.msra.mxu0 0.0
        %1619 = vmatprep.subr.mxu0 0.0
        %1620 = vmatpush2.msra.mxu0 0.0
        %1621 = vmatprep.subr.mxu0 0.0
        %1622 = vmatpush2.msra.mxu0 0.0
        %1623 = vmatprep.subr.mxu0 0.0
        %1624 = vmatpush2.msra.mxu0 0.0
        %1625 = vmatprep.subr.mxu0 0.0
        %1626 = vmatpush2.msra.mxu0 0.0
        %1627 = vmatprep.subr.mxu0 0.0
        %1628 = vmatpush2.msra.mxu0 0.0
        %1629 = vmatprep.subr.mxu0 0.0
        %1630 = vmatpush2.msra.mxu0 0.0
        %1631 = vmatprep.subr.mxu0 0.0
        %1632 = vmatpush2.msra.mxu0 0.0
        %1633 = vmatprep.mubr.f32.mxu0 0.0
        %1634 = vmatmul.mubr.f32.gmra.mxu0 %v1469
        %v1635 = vpop.f32.mrf.mxu0
        %v1636 = vadd.f32 %v1450, %v1635
        %v1637 = vpop.f32.mrf.mxu0
        %v1638 = vadd.f32 %v1450, %v1637
        %1639 = vmatprep.mubr.f32.mxu0 0.0
        %1640 = vmatmul.mubr.f32.gmra.mxu0 %v1472
        %v1641 = vpop.f32.mrf.mxu0
        %v1642 = vadd.f32 %v1455, %v1641
        %v1643 = vpop.f32.mrf.mxu0
        %v1644 = vadd.f32 %v1455, %v1643
        %1645 = vmatprep.mubr.f32.mxu0 0.0
        %1646 = vmatmul.mubr.f32.gmra.mxu0 %v1475
        %v1647 = vpop.f32.mrf.mxu0
        %v1648 = vadd.f32 %v1460, %v1647
        %v1649 = vpop.f32.mrf.mxu0
        %v1650 = vadd.f32 %v1460, %v1649
        %1651 = vmatprep.mubr.f32.mxu0 0.0
        %1652 = vmatmul.mubr.f32.gmra.mxu0 %v1478
        %v1653 = vpop.f32.mrf.mxu0
        %v1654 = vadd.f32 %v1465, %v1653
        %v1655 = vpop.f32.mrf.mxu0
        %v1656 = vadd.f32 %v1465, %v1655
        %1657 = vdwg.mxu0
        %1658 = vmatprep.subr.mxu0 0.0
        %1659 = vmatpush1.msra.mxu0 0.0
        %1660 = vmatprep.subr.mxu0 0.0
        %1661 = vmatpush1.msra.mxu0 0.0
        %1662 = vmatprep.subr.mxu0 0.0
        %1663 = vmatpush1.msra.mxu0 0.0
        %1664 = vmatprep.subr.mxu0 0.0
        %1665 = vmatpush1.msra.mxu0 0.0
        %1666 = vmatprep.subr.mxu0 0.0
        %1667 = vmatpush1.msra.mxu0 0.0
        %1668 = vmatprep.subr.mxu0 0.0
        %1669 = vmatpush1.msra.mxu0 0.0
        %1670 = vmatprep.subr.mxu0 0.0
        %1671 = vmatpush1.msra.mxu0 0.0
        %1672 = vmatprep.subr.mxu0 0.0
        %1673 = vmatpush1.msra.mxu0 0.0
        %1674 = vmatprep.subr.mxu0 0.0
        %1675 = vmatpush1.msra.mxu0 0.0
        %1676 = vmatprep.subr.mxu0 0.0
        %1677 = vmatpush1.msra.mxu0 0.0
        %1678 = vmatprep.subr.mxu0 0.0
        %1679 = vmatpush1.msra.mxu0 0.0
        %1680 = vmatprep.subr.mxu0 0.0
        %1681 = vmatpush1.msra.mxu0 0.0
        %1682 = vmatprep.subr.mxu0 %v1436
        %1683 = vmatpush1.msra.mxu0 %v1435
        %1684 = vmatprep.subr.mxu0 %v1428
        %1685 = vmatpush1.msra.mxu0 %v1427
        %1686 = vmatprep.subr.mxu0 %v1420
        %1687 = vmatpush1.msra.mxu0 %v1419
        %1688 = vmatprep.subr.mxu0 %v1412
        %1689 = vmatpush1.msra.mxu0 %v1411
        %1690 = vmatprep.subr.mxu0 0.0
        %1691 = vmatpush2.msra.mxu0 0.0
        %1692 = vmatprep.subr.mxu0 0.0
        %1693 = vmatpush2.msra.mxu0 0.0
        %1694 = vmatprep.subr.mxu0 0.0
        %1695 = vmatpush2.msra.mxu0 0.0
        %1696 = vmatprep.subr.mxu0 0.0
        %1697 = vmatpush2.msra.mxu0 0.0
        %1698 = vmatprep.subr.mxu0 0.0
        %1699 = vmatpush2.msra.mxu0 0.0
        %1700 = vmatprep.subr.mxu0 0.0
        %1701 = vmatpush2.msra.mxu0 0.0
        %1702 = vmatprep.subr.mxu0 0.0
        %1703 = vmatpush2.msra.mxu0 0.0
        %1704 = vmatprep.subr.mxu0 0.0
        %1705 = vmatpush2.msra.mxu0 0.0
        %1706 = vmatprep.subr.mxu0 0.0
        %1707 = vmatpush2.msra.mxu0 0.0
        %1708 = vmatprep.subr.mxu0 0.0
        %1709 = vmatpush2.msra.mxu0 0.0
        %1710 = vmatprep.subr.mxu0 0.0
        %1711 = vmatpush2.msra.mxu0 0.0
        %1712 = vmatprep.subr.mxu0 0.0
        %1713 = vmatpush2.msra.mxu0 0.0
        %1714 = vmatprep.subr.mxu0 0.0
        %1715 = vmatpush2.msra.mxu0 0.0
        %1716 = vmatprep.subr.mxu0 0.0
        %1717 = vmatpush2.msra.mxu0 0.0
        %1718 = vmatprep.subr.mxu0 0.0
        %1719 = vmatpush2.msra.mxu0 0.0
        %1720 = vmatprep.subr.mxu0 0.0
        %1721 = vmatpush2.msra.mxu0 0.0
        %1722 = vmatprep.mubr.f32.mxu0 0.0
        %1723 = vmatmul.mubr.f32.gmra.mxu0 %v1469
        %v1724 = vpop.f32.mrf.mxu0
        %v1725 = vadd.f32 %v1450, %v1724
        %v1726 = vpop.f32.mrf.mxu0
        %v1727 = vadd.f32 %v1450, %v1726
        %1728 = vmatprep.mubr.f32.mxu0 0.0
        %1729 = vmatmul.mubr.f32.gmra.mxu0 %v1472
        %v1730 = vpop.f32.mrf.mxu0
        %v1731 = vadd.f32 %v1455, %v1730
        %v1732 = vpop.f32.mrf.mxu0
        %v1733 = vadd.f32 %v1455, %v1732
        %1734 = vmatprep.mubr.f32.mxu0 0.0
        %1735 = vmatmul.mubr.f32.gmra.mxu0 %v1475
        %v1736 = vpop.f32.mrf.mxu0
        %v1737 = vadd.f32 %v1460, %v1736
        %v1738 = vpop.f32.mrf.mxu0
        %v1739 = vadd.f32 %v1460, %v1738
        %1740 = vmatprep.mubr.f32.mxu0 0.0
        %1741 = vmatmul.mubr.f32.gmra.mxu0 %v1478
        %v1742 = vpop.f32.mrf.mxu0
        %v1743 = vadd.f32 %v1465, %v1742
        %v1744 = vpop.f32.mrf.mxu0
        %v1745 = vadd.f32 %v1465, %v1744
        %1746 = vdwg.mxu0
        %1747 = vmatprep.subr.mxu0 0.0
        %1748 = vmatpush1.msra.mxu0 0.0
        %1749 = vmatprep.subr.mxu0 0.0
        %1750 = vmatpush1.msra.mxu0 0.0
        %1751 = vmatprep.subr.mxu0 0.0
        %1752 = vmatpush1.msra.mxu0 0.0
        %1753 = vmatprep.subr.mxu0 0.0
        %1754 = vmatpush1.msra.mxu0 0.0
        %1755 = vmatprep.subr.mxu0 0.0
        %1756 = vmatpush1.msra.mxu0 0.0
        %1757 = vmatprep.subr.mxu0 0.0
        %1758 = vmatpush1.msra.mxu0 0.0
        %1759 = vmatprep.subr.mxu0 0.0
        %1760 = vmatpush1.msra.mxu0 0.0
        %1761 = vmatprep.subr.mxu0 0.0
        %1762 = vmatpush1.msra.mxu0 0.0
        %1763 = vmatprep.subr.mxu0 0.0
        %1764 = vmatpush1.msra.mxu0 0.0
        %1765 = vmatprep.subr.mxu0 0.0
        %1766 = vmatpush1.msra.mxu0 0.0
        %1767 = vmatprep.subr.mxu0 0.0
        %1768 = vmatpush1.msra.mxu0 0.0
        %1769 = vmatprep.subr.mxu0 0.0
        %1770 = vmatpush1.msra.mxu0 0.0
        %1771 = vmatprep.subr.mxu0 %v1438
        %1772 = vmatpush1.msra.mxu0 %v1437
        %1773 = vmatprep.subr.mxu0 %v1430
        %1774 = vmatpush1.msra.mxu0 %v1429
        %1775 = vmatprep.subr.mxu0 %v1422
        %1776 = vmatpush1.msra.mxu0 %v1421
        %1777 = vmatprep.subr.mxu0 %v1414
        %1778 = vmatpush1.msra.mxu0 %v1413
        %1779 = vmatprep.subr.mxu0 0.0
        %1780 = vmatpush2.msra.mxu0 0.0
        %1781 = vmatprep.subr.mxu0 0.0
        %1782 = vmatpush2.msra.mxu0 0.0
        %1783 = vmatprep.subr.mxu0 0.0
        %1784 = vmatpush2.msra.mxu0 0.0
        %1785 = vmatprep.subr.mxu0 0.0
        %1786 = vmatpush2.msra.mxu0 0.0
        %1787 = vmatprep.subr.mxu0 0.0
        %1788 = vmatpush2.msra.mxu0 0.0
        %1789 = vmatprep.subr.mxu0 0.0
        %1790 = vmatpush2.msra.mxu0 0.0
        %1791 = vmatprep.subr.mxu0 0.0
        %1792 = vmatpush2.msra.mxu0 0.0
        %1793 = vmatprep.subr.mxu0 0.0
        %1794 = vmatpush2.msra.mxu0 0.0
        %1795 = vmatprep.subr.mxu0 0.0
        %1796 = vmatpush2.msra.mxu0 0.0
        %1797 = vmatprep.subr.mxu0 0.0
        %1798 = vmatpush2.msra.mxu0 0.0
        %1799 = vmatprep.subr.mxu0 0.0
        %1800 = vmatpush2.msra.mxu0 0.0
        %1801 = vmatprep.subr.mxu0 0.0
        %1802 = vmatpush2.msra.mxu0 0.0
        %1803 = vmatprep.subr.mxu0 0.0
        %1804 = vmatpush2.msra.mxu0 0.0
        %1805 = vmatprep.subr.mxu0 0.0
        %1806 = vmatpush2.msra.mxu0 0.0
        %1807 = vmatprep.subr.mxu0 0.0
        %1808 = vmatpush2.msra.mxu0 0.0
        %1809 = vmatprep.subr.mxu0 0.0
        %1810 = vmatpush2.msra.mxu0 0.0
        %1811 = vmatprep.mubr.f32.mxu0 0.0
        %1812 = vmatmul.mubr.f32.gmra.mxu0 %v1469
        %v1813 = vpop.f32.mrf.mxu0
        %v1814 = vadd.f32 %v1450, %v1813
        %v1815 = vpop.f32.mrf.mxu0
        %v1816 = vadd.f32 %v1450, %v1815
        %1817 = vmatprep.mubr.f32.mxu0 0.0
        %1818 = vmatmul.mubr.f32.gmra.mxu0 %v1472
        %v1819 = vpop.f32.mrf.mxu0
        %v1820 = vadd.f32 %v1455, %v1819
        %v1821 = vpop.f32.mrf.mxu0
        %v1822 = vadd.f32 %v1455, %v1821
        %1823 = vmatprep.mubr.f32.mxu0 0.0
        %1824 = vmatmul.mubr.f32.gmra.mxu0 %v1475
        %v1825 = vpop.f32.mrf.mxu0
        %v1826 = vadd.f32 %v1460, %v1825
        %v1827 = vpop.f32.mrf.mxu0
        %v1828 = vadd.f32 %v1460, %v1827
        %1829 = vmatprep.mubr.f32.mxu0 0.0
        %1830 = vmatmul.mubr.f32.gmra.mxu0 %v1478
        %v1831 = vpop.f32.mrf.mxu0
        %v1832 = vadd.f32 %v1465, %v1831
        %v1833 = vpop.f32.mrf.mxu0
        %v1834 = vadd.f32 %v1465, %v1833
        %1835 = vdwg.mxu0
        %vm1836 = vcmp.gt.f32.partialorder %v1547, 0.0
        %vm1837 = vcmp.gt.f32.partialorder %v1549, 0.0
        %vm1838 = vcmp.gt.f32.partialorder %v1636, 0.0
        %vm1839 = vcmp.gt.f32.partialorder %v1638, 0.0
        %vm1840 = vcmp.gt.f32.partialorder %v1725, 0.0
        %vm1841 = vcmp.gt.f32.partialorder %v1727, 0.0
        %vm1842 = vcmp.gt.f32.partialorder %v1814, 0.0
        %vm1843 = vcmp.gt.f32.partialorder %v1816, 0.0
        %vm1844 = vcmp.gt.f32.partialorder %v1553, 0.0
        %vm1845 = vcmp.gt.f32.partialorder %v1555, 0.0
        %vm1846 = vcmp.gt.f32.partialorder %v1642, 0.0
        %vm1847 = vcmp.gt.f32.partialorder %v1644, 0.0
        %vm1848 = vcmp.gt.f32.partialorder %v1731, 0.0
        %vm1849 = vcmp.gt.f32.partialorder %v1733, 0.0
        %vm1850 = vcmp.gt.f32.partialorder %v1820, 0.0
        %vm1851 = vcmp.gt.f32.partialorder %v1822, 0.0
        %vm1852 = vcmp.gt.f32.partialorder %v1559, 0.0
        %vm1853 = vcmp.gt.f32.partialorder %v1561, 0.0
        %vm1854 = vcmp.gt.f32.partialorder %v1648, 0.0
        %vm1855 = vcmp.gt.f32.partialorder %v1650, 0.0
        %vm1856 = vcmp.gt.f32.partialorder %v1737, 0.0
        %vm1857 = vcmp.gt.f32.partialorder %v1739, 0.0
        %vm1858 = vcmp.gt.f32.partialorder %v1826, 0.0
        %vm1859 = vcmp.gt.f32.partialorder %v1828, 0.0
        %vm1860 = vcmp.gt.f32.partialorder %v1565, 0.0
        %vm1861 = vcmp.gt.f32.partialorder %v1567, 0.0
        %vm1862 = vcmp.gt.f32.partialorder %v1654, 0.0
        %vm1863 = vcmp.gt.f32.partialorder %v1656, 0.0
        %vm1864 = vcmp.gt.f32.partialorder %v1743, 0.0
        %vm1865 = vcmp.gt.f32.partialorder %v1745, 0.0
        %vm1866 = vcmp.gt.f32.partialorder %v1832, 0.0
        %vm1867 = vcmp.gt.f32.partialorder %v1834, 0.0
        %v1868 = vmul.f32 %v1547, 0.2
        %v1869 = vmul.f32 %v1549, 0.2
        %v1870 = vmul.f32 %v1636, 0.2
        %v1871 = vmul.f32 %v1638, 0.2
        %v1872 = vmul.f32 %v1725, 0.2
        %v1873 = vmul.f32 %v1727, 0.2
        %v1874 = vmul.f32 %v1814, 0.2
        %v1875 = vmul.f32 %v1816, 0.2
        %v1876 = vmul.f32 %v1553, 0.2
        %v1877 = vmul.f32 %v1555, 0.2
        %v1878 = vmul.f32 %v1642, 0.2
        %v1879 = vmul.f32 %v1644, 0.2
        %v1880 = vmul.f32 %v1731, 0.2
        %v1881 = vmul.f32 %v1733, 0.2
        %v1882 = vmul.f32 %v1820, 0.2
        %v1883 = vmul.f32 %v1822, 0.2
        %v1884 = vmul.f32 %v1559, 0.2
        %v1885 = vmul.f32 %v1561, 0.2
        %v1886 = vmul.f32 %v1648, 0.2
        %v1887 = vmul.f32 %v1650, 0.2
        %v1888 = vmul.f32 %v1737, 0.2
        %v1889 = vmul.f32 %v1739, 0.2
        %v1890 = vmul.f32 %v1826, 0.2
        %v1891 = vmul.f32 %v1828, 0.2
        %v1892 = vmul.f32 %v1565, 0.2
        %v1893 = vmul.f32 %v1567, 0.2
        %v1894 = vmul.f32 %v1654, 0.2
        %v1895 = vmul.f32 %v1656, 0.2
        %v1896 = vmul.f32 %v1743, 0.2
        %v1897 = vmul.f32 %v1745, 0.2
        %v1898 = vmul.f32 %v1832, 0.2
        %v1899 = vmul.f32 %v1834, 0.2
        %v1900 = vsel %vm1836, %v1547, %v1868
        %v1901 = vsel %vm1837, %v1549, %v1869
        %v1902 = vsel %vm1838, %v1636, %v1870
        %v1903 = vsel %vm1839, %v1638, %v1871
        %v1904 = vsel %vm1840, %v1725, %v1872
        %v1905 = vsel %vm1841, %v1727, %v1873
        %v1906 = vsel %vm1842, %v1814, %v1874
        %v1907 = vsel %vm1843, %v1816, %v1875
        %v1908 = vsel %vm1844, %v1553, %v1876
        %v1909 = vsel %vm1845, %v1555, %v1877
        %v1910 = vsel %vm1846, %v1642, %v1878
        %v1911 = vsel %vm1847, %v1644, %v1879
        %v1912 = vsel %vm1848, %v1731, %v1880
        %v1913 = vsel %vm1849, %v1733, %v1881
        %v1914 = vsel %vm1850, %v1820, %v1882
        %v1915 = vsel %vm1851, %v1822, %v1883
        %v1916 = vsel %vm1852, %v1559, %v1884
        %v1917 = vsel %vm1853, %v1561, %v1885
        %v1918 = vsel %vm1854, %v1648, %v1886
        %v1919 = vsel %vm1855, %v1650, %v1887
        %v1920 = vsel %vm1856, %v1737, %v1888
        %v1921 = vsel %vm1857, %v1739, %v1889
        %v1922 = vsel %vm1858, %v1826, %v1890
        %v1923 = vsel %vm1859, %v1828, %v1891
        %v1924 = vsel %vm1860, %v1565, %v1892
        %v1925 = vsel %vm1861, %v1567, %v1893
        %v1926 = vsel %vm1862, %v1654, %v1894
        %v1927 = vsel %vm1863, %v1656, %v1895
        %v1928 = vsel %vm1864, %v1743, %v1896
        %v1929 = vsel %vm1865, %v1745, %v1897
        %v1930 = vsel %vm1866, %v1832, %v1898
        %v1931 = vsel %vm1867, %v1834, %v1899
        %v1932 = vadd.f32 %v1900, %v1901
        %v1933 = vadd.f32 %v1932, %v1902
        %v1934 = vadd.f32 %v1933, %v1903
        %v1935 = vadd.f32 %v1934, %v1904
        %v1936 = vadd.f32 %v1935, %v1905
        %v1937 = vadd.f32 %v1936, %v1906
        %v1938 = vadd.f32 %v1937, %v1907
        %1939 = vadd.xlane.f32.xlu0 %v1938
        %v1940 = vpop.xlane.xlu0 %1939
        %v1941 = vadd.f32 %v1908, %v1909
        %v1942 = vadd.f32 %v1941, %v1910
        %v1943 = vadd.f32 %v1942, %v1911
        %v1944 = vadd.f32 %v1943, %v1912
        %v1945 = vadd.f32 %v1944, %v1913
        %v1946 = vadd.f32 %v1945, %v1914
        %v1947 = vadd.f32 %v1946, %v1915
        %1948 = vadd.xlane.f32.xlu0 %v1947
        %v1949 = vpop.xlane.xlu0 %1948
        %v1950 = vadd.f32 %v1916, %v1917
        %v1951 = vadd.f32 %v1950, %v1918
        %v1952 = vadd.f32 %v1951, %v1919
        %v1953 = vadd.f32 %v1952, %v1920
        %v1954 = vadd.f32 %v1953, %v1921
        %v1955 = vadd.f32 %v1954, %v1922
        %v1956 = vadd.f32 %v1955, %v1923
        %1957 = vadd.xlane.f32.xlu0 %v1956
        %v1958 = vpop.xlane.xlu0 %1957
        %v1959 = vadd.f32 %v1924, %v1925
        %v1960 = vadd.f32 %v1959, %v1926
        %v1961 = vadd.f32 %v1960, %v1927
        %v1962 = vadd.f32 %v1961, %v1928
        %v1963 = vadd.f32 %v1962, %v1929
        %v1964 = vadd.f32 %v1963, %v1930
        %v1965 = vadd.f32 %v1964, %v1931
        %1966 = vadd.xlane.f32.xlu0 %v1965
        %v1967 = vpop.xlane.xlu0 %1966
        %v1968 = vrcp.pop 1024.0
        %v1969 = vmul.f32 %v1940, %v1968
        %v1970 = vmul.f32 %v1949, %v1968
        %v1971 = vmul.f32 %v1958, %v1968
        %v1972 = vmul.f32 %v1967, %v1968
        %v1973 = vld [vmem:[%s6] sm:$0xff]
        %v1974 = vld [vmem:[%s6 + $0x8] sm:$0xff]
        %v1975 = vld [vmem:[%s6 + $0x10] sm:$0xff]
        %v1976 = vld [vmem:[%s6 + $0x18] sm:$0xff]
        %v1977 = vmul.f32 %v1969, %v1973
        %v1978 = vmul.f32 %v1970, %v1974
        %v1979 = vmul.f32 %v1971, %v1975
        %v1980 = vmul.f32 %v1972, %v1976
        %vm1981 = vcmask 7168
        %v1982 = vsel %vm1981, %v1977, 0.0
        %v1983 = vsel %vm1981, %v1978, 0.0
        %v1984 = vadd.f32 %v1982, %v1983
        %v1985 = vsel %vm1981, %v1979, 0.0
        %v1986 = vadd.f32 %v1984, %v1985
        %v1987 = vsel %vm1981, %v1980, 0.0
        %v1988 = vadd.f32 %v1986, %v1987
        %v1989 = vrot.slane %v1988, 4
        %v1990 = vadd.f32 %v1988, %v1989
        %v1991 = vrot.slane %v1990, 2
        %v1992 = vadd.f32 %v1990, %v1991
        %v1993 = vrot.slane %v1992, 1
        %v1994 = vadd.f32 %v1992, %v1993
        %v1995 = vld [vmem:[#allocation2] sm:$0x1]
        %v1996 = vadd.f32 %v1994, %v1995
        %v1997 = vsub.f32 0.0, %v1996
        %v1998 = vmax.f32 %v1997, 0.0
        %v1999 = vsub.f32 0.0, %v1997
        %vm2000 = vcmp.ne.f32.partialorder %v1999, %v1999
        %v2001 = vadd.f32 %v1997, 0.0
        %v2002 = vand.u32 2147483647, %v1999
        %v2003 = vsub.f32 0.0, %v2002
        %v2004 = vmul.f32 %v2003, 1.442695
        %v2005 = vpow.pop %v2004
        %v2006 = vadd.f32 %v2005, 1.0
        %v2007 = vlog2.pop %v2006
        %v2008 = vmul.f32 %v2007, 0.6931472
        %v2009 = vmul.f32 -0.5, %v2005
        %v2010 = vadd.f32 %v2009, 1.0
        %v2011 = vmul.f32 %v2010, %v2005
        %v2012 = vand.u32 2147483647, %v2005
        %vm2013 = vcmp.lt.f32.partialorder %v2012, 0.0004427343
        %v2014 = vsel %vm2013, %v2011, %v2008
        %v2015 = vadd.f32 %v1998, %v2014
        %v2016 = vsel %vm2000, %v2001, %v2015
        %vm2017 = vcmask 0
        %2018 = vst.msk [vmem:[%s318] sm:$0x1] %vm2017, %v2016
        %p2019 = scmp.lt.s32.totalorder %s22, 1
        %s2020 = scalar_select %p2019, %s22, 1
        %s2021 = scalar_lea.vmem %s8, %s2020
        // Predicated region
        $region57: #{criterion_forward.1} parent=51 // pred_check
          %p2022 = pneg %p213
        $region58: #{criterion_forward.1} parent=51 // pred_check_branch
          %2024 = sbr.rel (%p2022) target = $region60
        $region59: #{criterion_forward.1} parent=51 // pred_region
          _
        $region60: #{criterion_forward.1} parent=51 // pred_fallthru
          _
      $region52: #{criterion_forward.1} parent=5 // pred_fallthru
        _
      %p2025 = scmp.le.s32.totalorder 2, %s17
      // Predicated region
      $region61: #{criterion_forward.1} parent=5 // pred_check
        %p2026 = pneg %p2025
      $region62: #{criterion_forward.1} parent=5 // pred_check_branch
        %2028 = sbr.rel (%p2026) target = $region64
      $region63: #{criterion_forward.1} parent=5 // pred_region
        %s2029 = ssub.s32 %s17, 2
        // Predicated region
        $region65: #{criterion_forward.1} parent=63 // pred_check
          %p2030 = pneg %p219
        $region66: #{criterion_forward.1} parent=63 // pred_check_branch
          %2032 = sbr.rel (%p2030) target = $region68
        $region67: #{criterion_forward.1} parent=63 // pred_region
          %p2033 = scmp.lt.s32.totalorder %s23, 1
          %s2034 = scalar_select %p2033, %s23, 1
          %s2035 = scalar_lea.vmem %s8, %s2034
        $region68: #{criterion_forward.1} parent=63 // pred_fallthru
          _
      $region64: #{criterion_forward.1} parent=5 // pred_fallthru
        _
    $region6: #{criterion_forward.1} parent=1 // loop_footer
      %s21 = sadd.s32 1, %s17
    $region7: #{criterion_forward.1} parent=1 // loop_footer_branch
      %16 = sbr.rel target = $region3
    $region8: #{criterion_forward.1} parent=1 // loop_exit
      _
    %2036 = vsyncpa [#allocation4], 1
    %s2037 = scalar_lea.sflag [#allocation4], 1
    %2038 = vsyncpa %s2037, 1

</llo_original>
